<compile_context>
chip_gen: v7x
topology: tpu7x:2x2x1
jax: 0.10.0
libtpu: 0.0.40
codegen_flags: <defaults>
</compile_context>

<pallas_src>
import math

import jax
import jax.numpy as jnp
from jax.experimental import pallas as pl
from jax.experimental.pallas import tpu as pltpu

F32 = jnp.float32
BF16 = jnp.bfloat16
ACT_PAD = 128            # lane-dense actor output width (only first 2 cols real)


def _round_up(x, m):
    return -(-x // m) * m


# ---------------------------------------------------------------------------
# Fused kernel: dense 1x1 conv + ReLU -> FC1 + ReLU -> GRU step (h0=0) -> actor
# ---------------------------------------------------------------------------
def fused_act_kernel(x_ref, wc_ref, w1_ref, b1_ref,
                     wi_ref, bi_ref, bhn_ref, wa_ref, ba_ref,
                     act_ref, h_ref):
    HW, TB, C = x_ref.shape
    H = b1_ref.shape[1]
    HP = h_ref.shape[1]          # 128-aligned gate / hidden width

    wc = wc_ref[...]             # (C, 32) bf16 -- dense per-pixel conv weight

    # conv(1x1) + ReLU + NCHW Flatten + FC1, accumulated per spatial position.
    # x_ref[p] is a leading-dim slice and w1_ref[p] the matching (32, H) FC1
    # row-block, so no reshapes / transposes are needed in-kernel.
    # TODO(synk): at MXU-friendly production shapes, fuse the HW loop into one
    # (TB*HW, C) @ (C, 32) and one (TB, HW*32) @ (HW*32, H) matmul.
    acc = jnp.zeros((TB, H), F32)
    for p in range(HW):          # HW is static -> unrolled
        zp = jnp.maximum(
            jnp.dot(x_ref[p].astype(BF16), wc, preferred_element_type=F32), 0.0)
        acc = acc + jnp.dot(zp.astype(BF16), w1_ref[p],
                            preferred_element_type=F32)
    x1 = jnp.maximum(acc + b1_ref[...], 0.0)               # (TB, H) f32

    # GRU single step specialized for h0 == 0 (restart_batch=True):
    #   r = sig(x Wir + bir + bhr); z = sig(x Wiz + biz + bhz)
    #   n = tanh(x Win + bin + r * bhn); h' = (1 - z) * n
    # Gates packed into 128-lane-aligned blocks of width HP (pad cols stay 0).
    # TODO(synk): general nonzero-h0 path (restart_batch=False) not implemented.
    g = jnp.dot(x1.astype(BF16), wi_ref[...],
                preferred_element_type=F32) + bi_ref[...]   # (TB, 3*HP) f32
    r = jax.nn.sigmoid(g[:, 0 * HP:1 * HP])
    zg = jax.nn.sigmoid(g[:, 1 * HP:2 * HP])
    n = jnp.tanh(g[:, 2 * HP:3 * HP] + r * bhn_ref[...])
    hn = (1.0 - zg) * n                                     # (TB, HP)
    h_ref[...] = hn

    # Actor head -> lane-dense 128-wide output (cols >= 2 are junk, sliced off).
    act_ref[...] = jax.nn.sigmoid(
        jnp.dot(hn.astype(BF16), wa_ref[...], preferred_element_type=F32)
        + ba_ref[...])


# ---------------------------------------------------------------------------
# Wrapper: batch-tiled grid, weights VMEM-resident, outputs sliced to real size.
# ---------------------------------------------------------------------------
def actor_critic_act(state, packed, feature_dim, feature_ratio, hidden_dim):
    b, state_dim = state.shape
    C = feature_dim
    HW = feature_ratio * feature_ratio
    H = hidden_dim
    HP = packed["bhn"].shape[1]
    assert state_dim == C * HW

    # NCHW state row -> per-position rows: x3[p, b, c] = state[b, c*HW + p].
    # One tiny XLA permute of the activation (same bytes are DMA'd into the
    # kernel); the matching FC1-weight permutation was folded at pack time.
    x3 = state.astype(F32).reshape(b, C, HW).transpose(2, 0, 1)   # (HW, b, C)

    TB = b if b <= 128 else 128        # b <= 128: single full-array block, no pad
    bp = _round_up(b, TB)
    if bp != b:
        x3 = jnp.pad(x3, ((0, 0), (0, bp - b), (0, 0)))
    n_tiles = bp // TB

    flops = 2 * bp * (HW * C * 32 + HW * 32 * H + H * 3 * HP + HP * ACT_PAD)
    trans = bp * (3 * HP + ACT_PAD)
    bytes_accessed = int(
        x3.size * x3.dtype.itemsize
        + sum(int(v.size) * v.dtype.itemsize for v in packed.values())
        + bp * ACT_PAD * 4 + bp * HP * 4)

    grid_spec = pltpu.PrefetchScalarGridSpec(
        num_scalar_prefetch=0,
        grid=(n_tiles,),
        in_specs=[
            pl.BlockSpec((HW, TB, C), lambda i: (0, i, 0)),   # state tiles stream
            pl.BlockSpec((C, 32), lambda i: (0, 0)),          # weights: constant
            pl.BlockSpec((HW, 32, H), lambda i: (0, 0, 0)),   # block -> stay in VMEM
            pl.BlockSpec((1, H), lambda i: (0, 0)),
            pl.BlockSpec((H, 3 * HP), lambda i: (0, 0)),
            pl.BlockSpec((1, 3 * HP), lambda i: (0, 0)),
            pl.BlockSpec((1, HP), lambda i: (0, 0)),
            pl.BlockSpec((HP, ACT_PAD), lambda i: (0, 0)),
            pl.BlockSpec((1, ACT_PAD), lambda i: (0, 0)),
        ],
        out_specs=(
            pl.BlockSpec((TB, ACT_PAD), lambda i: (i, 0)),
            pl.BlockSpec((TB, HP), lambda i: (i, 0)),
        ),
    )

    # TODO(synk): in an RL rollout loop, keep weights resident across timesteps
    # (cross-pallas_call futures, pattern P10) instead of re-DMA every step.
    act_p, h_p = pl.pallas_call(
        fused_act_kernel,
        out_shape=(jax.ShapeDtypeStruct((bp, ACT_PAD), F32),
                   jax.ShapeDtypeStruct((bp, HP), F32)),
        grid_spec=grid_spec,
        compiler_params=pltpu.CompilerParams(
            dimension_semantics=("parallel",),     # v7x: shard batch tiles over 2 TCs
            vmem_limit_bytes=64 * 1024 * 1024),
        cost_estimate=pl.CostEstimate(flops=flops, transcendentals=trans,
                                      bytes_accessed=bytes_accessed),
    )(x3, packed["wc"], packed["w1"], packed["b1"],
      packed["wi"], packed["bi"], packed["bhn"], packed["wa"], packed["ba"])

    return act_p[:b, :2], h_p[:b, :H]


# ---------------------------------------------------------------------------
# Parameter init (PyTorch shapes) + host-side packing for the fused kernel.
# ---------------------------------------------------------------------------
def init_raw_params(key, feature_dim, state_dim, hidden_dim):
    fc1_in = int(state_dim * 32 / feature_dim)
    ks = jax.random.split(key, 9)

    def u(k, shape, fan_in):
        bound = 1.0 / math.sqrt(fan_in)
        return jax.random.uniform(k, shape, F32, -bound, bound)

    H = hidden_dim
    return {
        "conv_w": u(ks[0], (32, feature_dim, 1, 1), feature_dim),  # Conv2d, no bias
        "fc1_w": u(ks[1], (H, fc1_in), fc1_in),
        "fc1_b": u(ks[2], (H,), fc1_in),
        "w_ih": u(ks[3], (3 * H, H), H),     # GRU gates ordered (r, z, n)
        "w_hh": u(ks[4], (3 * H, H), H),
        "b_ih": u(ks[5], (3 * H,), H),
        "b_hh": u(ks[6], (3 * H,), H),
        "actor_w": u(ks[7], (2, H), H),
        "actor_b": u(ks[8], (2,), H),
        # TODO(synk): critic head Linear(hidden, 1) is unused by act(); not wired.
    }


def pack_params(raw, feature_dim, feature_ratio, hidden_dim):
    C, H = feature_dim, hidden_dim
    HW = feature_ratio * feature_ratio
    HP = max(128, _round_up(H, 128))

    # Dense per-pixel conv weight (replaces the 93.75%-zero block-diagonal one).
    wc = raw["conv_w"].reshape(32, C).T.astype(BF16)                  # (C, 32)

    # FC1 weight regrouped by spatial position: w1[p, o, h] = fc1_w[h, o*HW + p]
    # (folds the NCHW flatten order into the weight once, at pack time).
    w1 = raw["fc1_w"].T.reshape(32, HW, H).transpose(1, 0, 2).astype(BF16)

    # GRU input-gate weights/biases: one 128-aligned HP-wide block per gate
    # (r | z | n).  b_hh's r/z parts fold into the bias (h0 == 0); b_hn stays
    # separate because it is multiplied by r inside tanh.
    w_ih, b_ih, b_hh = raw["w_ih"], raw["b_ih"], raw["b_hh"]
    wi = jnp.zeros((H, 3 * HP), F32)
    bi = jnp.zeros((1, 3 * HP), F32)
    for k in range(3):
        wi = wi.at[:, k * HP:k * HP + H].set(w_ih[k * H:(k + 1) * H, :].T)
        gate_b = b_ih[k * H:(k + 1) * H]
        if k < 2:
            gate_b = gate_b + b_hh[k * H:(k + 1) * H]
        bi = bi.at[0, k * HP:k * HP + H].set(gate_b)
    bhn = jnp.zeros((1, HP), F32).at[0, :H].set(b_hh[2 * H:3 * H])

    wa = jnp.zeros((HP, ACT_PAD), F32).at[:H, :2].set(raw["actor_w"].T)
    ba = jnp.zeros((1, ACT_PAD), F32).at[0, :2].set(raw["actor_b"])

    return {
        "wc": wc,                                    # (C, 32)      bf16
        "w1": w1,                                    # (HW, 32, H)  bf16
        "b1": raw["fc1_b"].reshape(1, H).astype(F32),
        "wi": wi.astype(BF16),                       # (H, 3*HP)    bf16
        "bi": bi,                                    # (1, 3*HP)    f32
        "bhn": bhn,                                  # (1, HP)      f32
        "wa": wa.astype(BF16),                       # (HP, 128)    bf16
        "ba": ba,                                    # (1, 128)     f32
    }


# ---------------------------------------------------------------------------
# Pure-JAX reference implementing the PyTorch module semantics (full GRU path).
# ---------------------------------------------------------------------------
def reference_act(state, raw, feature_dim, feature_ratio, hidden_dim):
    b = state.shape[0]
    C, H, fr = feature_dim, hidden_dim, feature_ratio
    HW = fr * fr
    x = state.reshape(b, C, fr, fr)
    wc = raw["conv_w"].reshape(32, C)
    y = jnp.maximum(jnp.einsum("oc,bchw->bohw", wc, x), 0.0)      # 1x1 conv + ReLU
    z = y.reshape(b, 32 * HW)                                     # NCHW Flatten
    x1 = jnp.maximum(z @ raw["fc1_w"].T + raw["fc1_b"], 0.0)
    h = jnp.zeros((b, H), F32)                                    # restart_batch=True
    wi, wh = raw["w_ih"], raw["w_hh"]
    bi, bh = raw["b_ih"], raw["b_hh"]
    r = jax.nn.sigmoid(x1 @ wi[0 * H:1 * H].T + bi[0 * H:1 * H]
                       + h @ wh[0 * H:1 * H].T + bh[0 * H:1 * H])
    zg = jax.nn.sigmoid(x1 @ wi[1 * H:2 * H].T + bi[1 * H:2 * H]
                        + h @ wh[1 * H:2 * H].T + bh[1 * H:2 * H])
    n = jnp.tanh(x1 @ wi[2 * H:3 * H].T + bi[2 * H:3 * H]
                 + r * (h @ wh[2 * H:3 * H].T + bh[2 * H:3 * H]))
    hn = (1.0 - zg) * n + zg * h
    act = jax.nn.sigmoid(hn @ raw["actor_w"].T + raw["actor_b"])
    return act, hn


if __name__ == "__main__":
    # Small shapes: feature_dim=4, feature_ratio=4 -> state_dim=64, hidden=32, batch=2
    feature_dim = 4
    feature_ratio = 4
    state_dim = feature_dim * feature_ratio * feature_ratio   # 64
    hidden_dim = 32
    batch = 2

    key = jax.random.PRNGKey(0)
    k_param, k_state = jax.random.split(key)
    raw = init_raw_params(k_param, feature_dim, state_dim, hidden_dim)
    packed = pack_params(raw, feature_dim, feature_ratio, hidden_dim)
    state = jax.random.normal(k_state, (batch, state_dim), F32)

    action, hidden_out = actor_critic_act(state, packed, feature_dim,
                                          feature_ratio, hidden_dim)
    action = jax.block_until_ready(action)
    hidden_out = jax.block_until_ready(hidden_out)

    ref_action, ref_hidden = reference_act(state, raw, feature_dim,
                                           feature_ratio, hidden_dim)
    assert action.shape == (batch, 2) and hidden_out.shape == (batch, hidden_dim)
    # bf16 weight storage + MXU bf16 passes in both paths -> compare at 2e-2.
    assert jnp.allclose(action, ref_action, rtol=2e-2, atol=2e-2)
    assert jnp.allclose(hidden_out, ref_hidden, rtol=2e-2, atol=2e-2)

    print("KERNEL_OK")
</pallas_src>

<mosaic_0001>
module attributes {stable_mosaic.version = 11 : i64} {
  func.func @fused_act_kernel(%arg0: i32, %arg1: memref<16x2x4xf32, #tpu.memory_space<vmem>>, %arg2: memref<4x32xbf16, #tpu.memory_space<vmem>>, %arg3: memref<16x32x32xbf16, #tpu.memory_space<vmem>>, %arg4: memref<1x32xf32, #tpu.memory_space<vmem>>, %arg5: memref<32x384xbf16, #tpu.memory_space<vmem>>, %arg6: memref<1x384xf32, #tpu.memory_space<vmem>>, %arg7: memref<1x128xf32, #tpu.memory_space<vmem>>, %arg8: memref<128x128xbf16, #tpu.memory_space<vmem>>, %arg9: memref<1x128xf32, #tpu.memory_space<vmem>>, %arg10: memref<2x128xf32, #tpu.memory_space<vmem>>, %arg11: memref<2x128xf32, #tpu.memory_space<vmem>>) attributes {dimension_semantics = [#tpu.dimension_semantics<parallel>], iteration_bounds = array<i64: 1>, scalar_prefetch = 0 : i64, scratch_operands = 0 : i64, tpu.core_type = #tpu.core_type<tc>, window_params = [{transform_indices = @transform_0, window_bounds = array<i64: 16, 2, 4>}, {pipeline_mode = #tpu.pipeline_mode<synchronous>, transform_indices = @transform_1, window_bounds = array<i64: 4, 32>}, {pipeline_mode = #tpu.pipeline_mode<synchronous>, transform_indices = @transform_2, window_bounds = array<i64: 16, 32, 32>}, {pipeline_mode = #tpu.pipeline_mode<synchronous>, transform_indices = @transform_3, window_bounds = array<i64: 1, 32>}, {pipeline_mode = #tpu.pipeline_mode<synchronous>, transform_indices = @transform_4, window_bounds = array<i64: 32, 384>}, {pipeline_mode = #tpu.pipeline_mode<synchronous>, transform_indices = @transform_5, window_bounds = array<i64: 1, 384>}, {pipeline_mode = #tpu.pipeline_mode<synchronous>, transform_indices = @transform_6, window_bounds = array<i64: 1, 128>}, {pipeline_mode = #tpu.pipeline_mode<synchronous>, transform_indices = @transform_7, window_bounds = array<i64: 128, 128>}, {pipeline_mode = #tpu.pipeline_mode<synchronous>, transform_indices = @transform_8, window_bounds = array<i64: 1, 128>}, {transform_indices = @transform_9, window_bounds = array<i64: 2, 128>}, {transform_indices = @transform_10, window_bounds = array<i64: 2, 128>}]} {
    %c0 = arith.constant 0 : index
    %c0_0 = arith.constant 0 : index
    %0 = vector.load %arg2[%c0, %c0_0] : memref<4x32xbf16, #tpu.memory_space<vmem>>, vector<4x32xbf16>
    %cst = arith.constant 0.000000e+00 : f32
    %1 = vector.broadcast %cst : f32 to vector<2x32xf32>
    %c0_1 = arith.constant 0 : index
    %c0_2 = arith.constant 0 : index
    %c0_3 = arith.constant 0 : index
    %2 = vector.load %arg1[%c0_1, %c0_2, %c0_3] : memref<16x2x4xf32, #tpu.memory_space<vmem>>, vector<1x2x4xf32>
    %3 = vector.shape_cast %2 : vector<1x2x4xf32> to vector<2x4xf32>
    %4 = arith.truncf %3 : vector<2x4xf32> to vector<2x4xbf16>
    %cst_4 = arith.constant dense<0.000000e+00> : vector<2x32xf32>
    %5 = tpu.matmul %4, %0, %cst_4 {dimension_numbers = #tpu.dot_dimension_numbers<[1], [0], [0], [1], [0, 0, 1, 1], [], []>} : vector<2x4xbf16>, vector<4x32xbf16>, vector<2x32xf32> -> vector<2x32xf32>
    %cst_5 = arith.constant 0.000000e+00 : f32
    %6 = vector.broadcast %cst_5 : f32 to vector<2x32xf32>
    %7 = arith.maximumf %5, %6 : vector<2x32xf32>
    %8 = arith.truncf %7 : vector<2x32xf32> to vector<2x32xbf16>
    %c0_6 = arith.constant 0 : index
    %c0_7 = arith.constant 0 : index
    %c0_8 = arith.constant 0 : index
    %9 = vector.load %arg3[%c0_6, %c0_7, %c0_8] : memref<16x32x32xbf16, #tpu.memory_space<vmem>>, vector<1x32x32xbf16>
    %10 = vector.shape_cast %9 : vector<1x32x32xbf16> to vector<32x32xbf16>
    %cst_9 = arith.constant dense<0.000000e+00> : vector<2x32xf32>
    %11 = tpu.matmul %8, %10, %cst_9 {dimension_numbers = #tpu.dot_dimension_numbers<[1], [0], [0], [1], [0, 0, 1, 1], [], []>} : vector<2x32xbf16>, vector<32x32xbf16>, vector<2x32xf32> -> vector<2x32xf32>
    %12 = arith.addf %1, %11 : vector<2x32xf32>
    %c1 = arith.constant 1 : index
    %c0_10 = arith.constant 0 : index
    %c0_11 = arith.constant 0 : index
    %13 = vector.load %arg1[%c1, %c0_10, %c0_11] : memref<16x2x4xf32, #tpu.memory_space<vmem>>, vector<1x2x4xf32>
    %14 = vector.shape_cast %13 : vector<1x2x4xf32> to vector<2x4xf32>
    %15 = arith.truncf %14 : vector<2x4xf32> to vector<2x4xbf16>
    %cst_12 = arith.constant dense<0.000000e+00> : vector<2x32xf32>
    %16 = tpu.matmul %15, %0, %cst_12 {dimension_numbers = #tpu.dot_dimension_numbers<[1], [0], [0], [1], [0, 0, 1, 1], [], []>} : vector<2x4xbf16>, vector<4x32xbf16>, vector<2x32xf32> -> vector<2x32xf32>
    %cst_13 = arith.constant 0.000000e+00 : f32
    %17 = vector.broadcast %cst_13 : f32 to vector<2x32xf32>
    %18 = arith.maximumf %16, %17 : vector<2x32xf32>
    %19 = arith.truncf %18 : vector<2x32xf32> to vector<2x32xbf16>
    %c1_14 = arith.constant 1 : index
    %c0_15 = arith.constant 0 : index
    %c0_16 = arith.constant 0 : index
    %20 = vector.load %arg3[%c1_14, %c0_15, %c0_16] : memref<16x32x32xbf16, #tpu.memory_space<vmem>>, vector<1x32x32xbf16>
    %21 = vector.shape_cast %20 : vector<1x32x32xbf16> to vector<32x32xbf16>
    %cst_17 = arith.constant dense<0.000000e+00> : vector<2x32xf32>
    %22 = tpu.matmul %19, %21, %cst_17 {dimension_numbers = #tpu.dot_dimension_numbers<[1], [0], [0], [1], [0, 0, 1, 1], [], []>} : vector<2x32xbf16>, vector<32x32xbf16>, vector<2x32xf32> -> vector<2x32xf32>
    %23 = arith.addf %12, %22 : vector<2x32xf32>
    %c2 = arith.constant 2 : index
    %c0_18 = arith.constant 0 : index
    %c0_19 = arith.constant 0 : index
    %24 = vector.load %arg1[%c2, %c0_18, %c0_19] : memref<16x2x4xf32, #tpu.memory_space<vmem>>, vector<1x2x4xf32>
    %25 = vector.shape_cast %24 : vector<1x2x4xf32> to vector<2x4xf32>
    %26 = arith.truncf %25 : vector<2x4xf32> to vector<2x4xbf16>
    %cst_20 = arith.constant dense<0.000000e+00> : vector<2x32xf32>
    %27 = tpu.matmul %26, %0, %cst_20 {dimension_numbers = #tpu.dot_dimension_numbers<[1], [0], [0], [1], [0, 0, 1, 1], [], []>} : vector<2x4xbf16>, vector<4x32xbf16>, vector<2x32xf32> -> vector<2x32xf32>
    %cst_21 = arith.constant 0.000000e+00 : f32
    %28 = vector.broadcast %cst_21 : f32 to vector<2x32xf32>
    %29 = arith.maximumf %27, %28 : vector<2x32xf32>
    %30 = arith.truncf %29 : vector<2x32xf32> to vector<2x32xbf16>
    %c2_22 = arith.constant 2 : index
    %c0_23 = arith.constant 0 : index
    %c0_24 = arith.constant 0 : index
    %31 = vector.load %arg3[%c2_22, %c0_23, %c0_24] : memref<16x32x32xbf16, #tpu.memory_space<vmem>>, vector<1x32x32xbf16>
    %32 = vector.shape_cast %31 : vector<1x32x32xbf16> to vector<32x32xbf16>
    %cst_25 = arith.constant dense<0.000000e+00> : vector<2x32xf32>
    %33 = tpu.matmul %30, %32, %cst_25 {dimension_numbers = #tpu.dot_dimension_numbers<[1], [0], [0], [1], [0, 0, 1, 1], [], []>} : vector<2x32xbf16>, vector<32x32xbf16>, vector<2x32xf32> -> vector<2x32xf32>
    %34 = arith.addf %23, %33 : vector<2x32xf32>
    %c3 = arith.constant 3 : index
    %c0_26 = arith.constant 0 : index
    %c0_27 = arith.constant 0 : index
    %35 = vector.load %arg1[%c3, %c0_26, %c0_27] : memref<16x2x4xf32, #tpu.memory_space<vmem>>, vector<1x2x4xf32>
    %36 = vector.shape_cast %35 : vector<1x2x4xf32> to vector<2x4xf32>
    %37 = arith.truncf %36 : vector<2x4xf32> to vector<2x4xbf16>
    %cst_28 = arith.constant dense<0.000000e+00> : vector<2x32xf32>
    %38 = tpu.matmul %37, %0, %cst_28 {dimension_numbers = #tpu.dot_dimension_numbers<[1], [0], [0], [1], [0, 0, 1, 1], [], []>} : vector<2x4xbf16>, vector<4x32xbf16>, vector<2x32xf32> -> vector<2x32xf32>
    %cst_29 = arith.constant 0.000000e+00 : f32
    %39 = vector.broadcast %cst_29 : f32 to vector<2x32xf32>
    %40 = arith.maximumf %38, %39 : vector<2x32xf32>
    %41 = arith.truncf %40 : vector<2x32xf32> to vector<2x32xbf16>
    %c3_30 = arith.constant 3 : index
    %c0_31 = arith.constant 0 : index
    %c0_32 = arith.constant 0 : index
    %42 = vector.load %arg3[%c3_30, %c0_31, %c0_32] : memref<16x32x32xbf16, #tpu.memory_space<vmem>>, vector<1x32x32xbf16>
    %43 = vector.shape_cast %42 : vector<1x32x32xbf16> to vector<32x32xbf16>
    %cst_33 = arith.constant dense<0.000000e+00> : vector<2x32xf32>
    %44 = tpu.matmul %41, %43, %cst_33 {dimension_numbers = #tpu.dot_dimension_numbers<[1], [0], [0], [1], [0, 0, 1, 1], [], []>} : vector<2x32xbf16>, vector<32x32xbf16>, vector<2x32xf32> -> vector<2x32xf32>
    %45 = arith.addf %34, %44 : vector<2x32xf32>
    %c4 = arith.constant 4 : index
    %c0_34 = arith.constant 0 : index
    %c0_35 = arith.constant 0 : index
    %46 = vector.load %arg1[%c4, %c0_34, %c0_35] : memref<16x2x4xf32, #tpu.memory_space<vmem>>, vector<1x2x4xf32>
    %47 = vector.shape_cast %46 : vector<1x2x4xf32> to vector<2x4xf32>
    %48 = arith.truncf %47 : vector<2x4xf32> to vector<2x4xbf16>
    %cst_36 = arith.constant dense<0.000000e+00> : vector<2x32xf32>
    %49 = tpu.matmul %48, %0, %cst_36 {dimension_numbers = #tpu.dot_dimension_numbers<[1], [0], [0], [1], [0, 0, 1, 1], [], []>} : vector<2x4xbf16>, vector<4x32xbf16>, vector<2x32xf32> -> vector<2x32xf32>
    %cst_37 = arith.constant 0.000000e+00 : f32
    %50 = vector.broadcast %cst_37 : f32 to vector<2x32xf32>
    %51 = arith.maximumf %49, %50 : vector<2x32xf32>
    %52 = arith.truncf %51 : vector<2x32xf32> to vector<2x32xbf16>
    %c4_38 = arith.constant 4 : index
    %c0_39 = arith.constant 0 : index
    %c0_40 = arith.constant 0 : index
    %53 = vector.load %arg3[%c4_38, %c0_39, %c0_40] : memref<16x32x32xbf16, #tpu.memory_space<vmem>>, vector<1x32x32xbf16>
    %54 = vector.shape_cast %53 : vector<1x32x32xbf16> to vector<32x32xbf16>
    %cst_41 = arith.constant dense<0.000000e+00> : vector<2x32xf32>
    %55 = tpu.matmul %52, %54, %cst_41 {dimension_numbers = #tpu.dot_dimension_numbers<[1], [0], [0], [1], [0, 0, 1, 1], [], []>} : vector<2x32xbf16>, vector<32x32xbf16>, vector<2x32xf32> -> vector<2x32xf32>
    %56 = arith.addf %45, %55 : vector<2x32xf32>
    %c5 = arith.constant 5 : index
    %c0_42 = arith.constant 0 : index
    %c0_43 = arith.constant 0 : index
    %57 = vector.load %arg1[%c5, %c0_42, %c0_43] : memref<16x2x4xf32, #tpu.memory_space<vmem>>, vector<1x2x4xf32>
    %58 = vector.shape_cast %57 : vector<1x2x4xf32> to vector<2x4xf32>
    %59 = arith.truncf %58 : vector<2x4xf32> to vector<2x4xbf16>
    %cst_44 = arith.constant dense<0.000000e+00> : vector<2x32xf32>
    %60 = tpu.matmul %59, %0, %cst_44 {dimension_numbers = #tpu.dot_dimension_numbers<[1], [0], [0], [1], [0, 0, 1, 1], [], []>} : vector<2x4xbf16>, vector<4x32xbf16>, vector<2x32xf32> -> vector<2x32xf32>
    %cst_45 = arith.constant 0.000000e+00 : f32
    %61 = vector.broadcast %cst_45 : f32 to vector<2x32xf32>
    %62 = arith.maximumf %60, %61 : vector<2x32xf32>
    %63 = arith.truncf %62 : vector<2x32xf32> to vector<2x32xbf16>
    %c5_46 = arith.constant 5 : index
    %c0_47 = arith.constant 0 : index
    %c0_48 = arith.constant 0 : index
    %64 = vector.load %arg3[%c5_46, %c0_47, %c0_48] : memref<16x32x32xbf16, #tpu.memory_space<vmem>>, vector<1x32x32xbf16>
    %65 = vector.shape_cast %64 : vector<1x32x32xbf16> to vector<32x32xbf16>
    %cst_49 = arith.constant dense<0.000000e+00> : vector<2x32xf32>
    %66 = tpu.matmul %63, %65, %cst_49 {dimension_numbers = #tpu.dot_dimension_numbers<[1], [0], [0], [1], [0, 0, 1, 1], [], []>} : vector<2x32xbf16>, vector<32x32xbf16>, vector<2x32xf32> -> vector<2x32xf32>
    %67 = arith.addf %56, %66 : vector<2x32xf32>
    %c6 = arith.constant 6 : index
    %c0_50 = arith.constant 0 : index
    %c0_51 = arith.constant 0 : index
    %68 = vector.load %arg1[%c6, %c0_50, %c0_51] : memref<16x2x4xf32, #tpu.memory_space<vmem>>, vector<1x2x4xf32>
    %69 = vector.shape_cast %68 : vector<1x2x4xf32> to vector<2x4xf32>
    %70 = arith.truncf %69 : vector<2x4xf32> to vector<2x4xbf16>
    %cst_52 = arith.constant dense<0.000000e+00> : vector<2x32xf32>
    %71 = tpu.matmul %70, %0, %cst_52 {dimension_numbers = #tpu.dot_dimension_numbers<[1], [0], [0], [1], [0, 0, 1, 1], [], []>} : vector<2x4xbf16>, vector<4x32xbf16>, vector<2x32xf32> -> vector<2x32xf32>
    %cst_53 = arith.constant 0.000000e+00 : f32
    %72 = vector.broadcast %cst_53 : f32 to vector<2x32xf32>
    %73 = arith.maximumf %71, %72 : vector<2x32xf32>
    %74 = arith.truncf %73 : vector<2x32xf32> to vector<2x32xbf16>
    %c6_54 = arith.constant 6 : index
    %c0_55 = arith.constant 0 : index
    %c0_56 = arith.constant 0 : index
    %75 = vector.load %arg3[%c6_54, %c0_55, %c0_56] : memref<16x32x32xbf16, #tpu.memory_space<vmem>>, vector<1x32x32xbf16>
    %76 = vector.shape_cast %75 : vector<1x32x32xbf16> to vector<32x32xbf16>
    %cst_57 = arith.constant dense<0.000000e+00> : vector<2x32xf32>
    %77 = tpu.matmul %74, %76, %cst_57 {dimension_numbers = #tpu.dot_dimension_numbers<[1], [0], [0], [1], [0, 0, 1, 1], [], []>} : vector<2x32xbf16>, vector<32x32xbf16>, vector<2x32xf32> -> vector<2x32xf32>
    %78 = arith.addf %67, %77 : vector<2x32xf32>
    %c7 = arith.constant 7 : index
    %c0_58 = arith.constant 0 : index
    %c0_59 = arith.constant 0 : index
    %79 = vector.load %arg1[%c7, %c0_58, %c0_59] : memref<16x2x4xf32, #tpu.memory_space<vmem>>, vector<1x2x4xf32>
    %80 = vector.shape_cast %79 : vector<1x2x4xf32> to vector<2x4xf32>
    %81 = arith.truncf %80 : vector<2x4xf32> to vector<2x4xbf16>
    %cst_60 = arith.constant dense<0.000000e+00> : vector<2x32xf32>
    %82 = tpu.matmul %81, %0, %cst_60 {dimension_numbers = #tpu.dot_dimension_numbers<[1], [0], [0], [1], [0, 0, 1, 1], [], []>} : vector<2x4xbf16>, vector<4x32xbf16>, vector<2x32xf32> -> vector<2x32xf32>
    %cst_61 = arith.constant 0.000000e+00 : f32
    %83 = vector.broadcast %cst_61 : f32 to vector<2x32xf32>
    %84 = arith.maximumf %82, %83 : vector<2x32xf32>
    %85 = arith.truncf %84 : vector<2x32xf32> to vector<2x32xbf16>
    %c7_62 = arith.constant 7 : index
    %c0_63 = arith.constant 0 : index
    %c0_64 = arith.constant 0 : index
    %86 = vector.load %arg3[%c7_62, %c0_63, %c0_64] : memref<16x32x32xbf16, #tpu.memory_space<vmem>>, vector<1x32x32xbf16>
    %87 = vector.shape_cast %86 : vector<1x32x32xbf16> to vector<32x32xbf16>
    %cst_65 = arith.constant dense<0.000000e+00> : vector<2x32xf32>
    %88 = tpu.matmul %85, %87, %cst_65 {dimension_numbers = #tpu.dot_dimension_numbers<[1], [0], [0], [1], [0, 0, 1, 1], [], []>} : vector<2x32xbf16>, vector<32x32xbf16>, vector<2x32xf32> -> vector<2x32xf32>
    %89 = arith.addf %78, %88 : vector<2x32xf32>
    %c8 = arith.constant 8 : index
    %c0_66 = arith.constant 0 : index
    %c0_67 = arith.constant 0 : index
    %90 = vector.load %arg1[%c8, %c0_66, %c0_67] : memref<16x2x4xf32, #tpu.memory_space<vmem>>, vector<1x2x4xf32>
    %91 = vector.shape_cast %90 : vector<1x2x4xf32> to vector<2x4xf32>
    %92 = arith.truncf %91 : vector<2x4xf32> to vector<2x4xbf16>
    %cst_68 = arith.constant dense<0.000000e+00> : vector<2x32xf32>
    %93 = tpu.matmul %92, %0, %cst_68 {dimension_numbers = #tpu.dot_dimension_numbers<[1], [0], [0], [1], [0, 0, 1, 1], [], []>} : vector<2x4xbf16>, vector<4x32xbf16>, vector<2x32xf32> -> vector<2x32xf32>
    %cst_69 = arith.constant 0.000000e+00 : f32
    %94 = vector.broadcast %cst_69 : f32 to vector<2x32xf32>
    %95 = arith.maximumf %93, %94 : vector<2x32xf32>
    %96 = arith.truncf %95 : vector<2x32xf32> to vector<2x32xbf16>
    %c8_70 = arith.constant 8 : index
    %c0_71 = arith.constant 0 : index
    %c0_72 = arith.constant 0 : index
    %97 = vector.load %arg3[%c8_70, %c0_71, %c0_72] : memref<16x32x32xbf16, #tpu.memory_space<vmem>>, vector<1x32x32xbf16>
    %98 = vector.shape_cast %97 : vector<1x32x32xbf16> to vector<32x32xbf16>
    %cst_73 = arith.constant dense<0.000000e+00> : vector<2x32xf32>
    %99 = tpu.matmul %96, %98, %cst_73 {dimension_numbers = #tpu.dot_dimension_numbers<[1], [0], [0], [1], [0, 0, 1, 1], [], []>} : vector<2x32xbf16>, vector<32x32xbf16>, vector<2x32xf32> -> vector<2x32xf32>
    %100 = arith.addf %89, %99 : vector<2x32xf32>
    %c9 = arith.constant 9 : index
    %c0_74 = arith.constant 0 : index
    %c0_75 = arith.constant 0 : index
    %101 = vector.load %arg1[%c9, %c0_74, %c0_75] : memref<16x2x4xf32, #tpu.memory_space<vmem>>, vector<1x2x4xf32>
    %102 = vector.shape_cast %101 : vector<1x2x4xf32> to vector<2x4xf32>
    %103 = arith.truncf %102 : vector<2x4xf32> to vector<2x4xbf16>
    %cst_76 = arith.constant dense<0.000000e+00> : vector<2x32xf32>
    %104 = tpu.matmul %103, %0, %cst_76 {dimension_numbers = #tpu.dot_dimension_numbers<[1], [0], [0], [1], [0, 0, 1, 1], [], []>} : vector<2x4xbf16>, vector<4x32xbf16>, vector<2x32xf32> -> vector<2x32xf32>
    %cst_77 = arith.constant 0.000000e+00 : f32
    %105 = vector.broadcast %cst_77 : f32 to vector<2x32xf32>
    %106 = arith.maximumf %104, %105 : vector<2x32xf32>
    %107 = arith.truncf %106 : vector<2x32xf32> to vector<2x32xbf16>
    %c9_78 = arith.constant 9 : index
    %c0_79 = arith.constant 0 : index
    %c0_80 = arith.constant 0 : index
    %108 = vector.load %arg3[%c9_78, %c0_79, %c0_80] : memref<16x32x32xbf16, #tpu.memory_space<vmem>>, vector<1x32x32xbf16>
    %109 = vector.shape_cast %108 : vector<1x32x32xbf16> to vector<32x32xbf16>
    %cst_81 = arith.constant dense<0.000000e+00> : vector<2x32xf32>
    %110 = tpu.matmul %107, %109, %cst_81 {dimension_numbers = #tpu.dot_dimension_numbers<[1], [0], [0], [1], [0, 0, 1, 1], [], []>} : vector<2x32xbf16>, vector<32x32xbf16>, vector<2x32xf32> -> vector<2x32xf32>
    %111 = arith.addf %100, %110 : vector<2x32xf32>
    %c10 = arith.constant 10 : index
    %c0_82 = arith.constant 0 : index
    %c0_83 = arith.constant 0 : index
    %112 = vector.load %arg1[%c10, %c0_82, %c0_83] : memref<16x2x4xf32, #tpu.memory_space<vmem>>, vector<1x2x4xf32>
    %113 = vector.shape_cast %112 : vector<1x2x4xf32> to vector<2x4xf32>
    %114 = arith.truncf %113 : vector<2x4xf32> to vector<2x4xbf16>
    %cst_84 = arith.constant dense<0.000000e+00> : vector<2x32xf32>
    %115 = tpu.matmul %114, %0, %cst_84 {dimension_numbers = #tpu.dot_dimension_numbers<[1], [0], [0], [1], [0, 0, 1, 1], [], []>} : vector<2x4xbf16>, vector<4x32xbf16>, vector<2x32xf32> -> vector<2x32xf32>
    %cst_85 = arith.constant 0.000000e+00 : f32
    %116 = vector.broadcast %cst_85 : f32 to vector<2x32xf32>
    %117 = arith.maximumf %115, %116 : vector<2x32xf32>
    %118 = arith.truncf %117 : vector<2x32xf32> to vector<2x32xbf16>
    %c10_86 = arith.constant 10 : index
    %c0_87 = arith.constant 0 : index
    %c0_88 = arith.constant 0 : index
    %119 = vector.load %arg3[%c10_86, %c0_87, %c0_88] : memref<16x32x32xbf16, #tpu.memory_space<vmem>>, vector<1x32x32xbf16>
    %120 = vector.shape_cast %119 : vector<1x32x32xbf16> to vector<32x32xbf16>
    %cst_89 = arith.constant dense<0.000000e+00> : vector<2x32xf32>
    %121 = tpu.matmul %118, %120, %cst_89 {dimension_numbers = #tpu.dot_dimension_numbers<[1], [0], [0], [1], [0, 0, 1, 1], [], []>} : vector<2x32xbf16>, vector<32x32xbf16>, vector<2x32xf32> -> vector<2x32xf32>
    %122 = arith.addf %111, %121 : vector<2x32xf32>
    %c11 = arith.constant 11 : index
    %c0_90 = arith.constant 0 : index
    %c0_91 = arith.constant 0 : index
    %123 = vector.load %arg1[%c11, %c0_90, %c0_91] : memref<16x2x4xf32, #tpu.memory_space<vmem>>, vector<1x2x4xf32>
    %124 = vector.shape_cast %123 : vector<1x2x4xf32> to vector<2x4xf32>
    %125 = arith.truncf %124 : vector<2x4xf32> to vector<2x4xbf16>
    %cst_92 = arith.constant dense<0.000000e+00> : vector<2x32xf32>
    %126 = tpu.matmul %125, %0, %cst_92 {dimension_numbers = #tpu.dot_dimension_numbers<[1], [0], [0], [1], [0, 0, 1, 1], [], []>} : vector<2x4xbf16>, vector<4x32xbf16>, vector<2x32xf32> -> vector<2x32xf32>
    %cst_93 = arith.constant 0.000000e+00 : f32
    %127 = vector.broadcast %cst_93 : f32 to vector<2x32xf32>
    %128 = arith.maximumf %126, %127 : vector<2x32xf32>
    %129 = arith.truncf %128 : vector<2x32xf32> to vector<2x32xbf16>
    %c11_94 = arith.constant 11 : index
    %c0_95 = arith.constant 0 : index
    %c0_96 = arith.constant 0 : index
    %130 = vector.load %arg3[%c11_94, %c0_95, %c0_96] : memref<16x32x32xbf16, #tpu.memory_space<vmem>>, vector<1x32x32xbf16>
    %131 = vector.shape_cast %130 : vector<1x32x32xbf16> to vector<32x32xbf16>
    %cst_97 = arith.constant dense<0.000000e+00> : vector<2x32xf32>
    %132 = tpu.matmul %129, %131, %cst_97 {dimension_numbers = #tpu.dot_dimension_numbers<[1], [0], [0], [1], [0, 0, 1, 1], [], []>} : vector<2x32xbf16>, vector<32x32xbf16>, vector<2x32xf32> -> vector<2x32xf32>
    %133 = arith.addf %122, %132 : vector<2x32xf32>
    %c12 = arith.constant 12 : index
    %c0_98 = arith.constant 0 : index
    %c0_99 = arith.constant 0 : index
    %134 = vector.load %arg1[%c12, %c0_98, %c0_99] : memref<16x2x4xf32, #tpu.memory_space<vmem>>, vector<1x2x4xf32>
    %135 = vector.shape_cast %134 : vector<1x2x4xf32> to vector<2x4xf32>
    %136 = arith.truncf %135 : vector<2x4xf32> to vector<2x4xbf16>
    %cst_100 = arith.constant dense<0.000000e+00> : vector<2x32xf32>
    %137 = tpu.matmul %136, %0, %cst_100 {dimension_numbers = #tpu.dot_dimension_numbers<[1], [0], [0], [1], [0, 0, 1, 1], [], []>} : vector<2x4xbf16>, vector<4x32xbf16>, vector<2x32xf32> -> vector<2x32xf32>
    %cst_101 = arith.constant 0.000000e+00 : f32
    %138 = vector.broadcast %cst_101 : f32 to vector<2x32xf32>
    %139 = arith.maximumf %137, %138 : vector<2x32xf32>
    %140 = arith.truncf %139 : vector<2x32xf32> to vector<2x32xbf16>
    %c12_102 = arith.constant 12 : index
    %c0_103 = arith.constant 0 : index
    %c0_104 = arith.constant 0 : index
    %141 = vector.load %arg3[%c12_102, %c0_103, %c0_104] : memref<16x32x32xbf16, #tpu.memory_space<vmem>>, vector<1x32x32xbf16>
    %142 = vector.shape_cast %141 : vector<1x32x32xbf16> to vector<32x32xbf16>
    %cst_105 = arith.constant dense<0.000000e+00> : vector<2x32xf32>
    %143 = tpu.matmul %140, %142, %cst_105 {dimension_numbers = #tpu.dot_dimension_numbers<[1], [0], [0], [1], [0, 0, 1, 1], [], []>} : vector<2x32xbf16>, vector<32x32xbf16>, vector<2x32xf32> -> vector<2x32xf32>
    %144 = arith.addf %133, %143 : vector<2x32xf32>
    %c13 = arith.constant 13 : index
    %c0_106 = arith.constant 0 : index
    %c0_107 = arith.constant 0 : index
    %145 = vector.load %arg1[%c13, %c0_106, %c0_107] : memref<16x2x4xf32, #tpu.memory_space<vmem>>, vector<1x2x4xf32>
    %146 = vector.shape_cast %145 : vector<1x2x4xf32> to vector<2x4xf32>
    %147 = arith.truncf %146 : vector<2x4xf32> to vector<2x4xbf16>
    %cst_108 = arith.constant dense<0.000000e+00> : vector<2x32xf32>
    %148 = tpu.matmul %147, %0, %cst_108 {dimension_numbers = #tpu.dot_dimension_numbers<[1], [0], [0], [1], [0, 0, 1, 1], [], []>} : vector<2x4xbf16>, vector<4x32xbf16>, vector<2x32xf32> -> vector<2x32xf32>
    %cst_109 = arith.constant 0.000000e+00 : f32
    %149 = vector.broadcast %cst_109 : f32 to vector<2x32xf32>
    %150 = arith.maximumf %148, %149 : vector<2x32xf32>
    %151 = arith.truncf %150 : vector<2x32xf32> to vector<2x32xbf16>
    %c13_110 = arith.constant 13 : index
    %c0_111 = arith.constant 0 : index
    %c0_112 = arith.constant 0 : index
    %152 = vector.load %arg3[%c13_110, %c0_111, %c0_112] : memref<16x32x32xbf16, #tpu.memory_space<vmem>>, vector<1x32x32xbf16>
    %153 = vector.shape_cast %152 : vector<1x32x32xbf16> to vector<32x32xbf16>
    %cst_113 = arith.constant dense<0.000000e+00> : vector<2x32xf32>
    %154 = tpu.matmul %151, %153, %cst_113 {dimension_numbers = #tpu.dot_dimension_numbers<[1], [0], [0], [1], [0, 0, 1, 1], [], []>} : vector<2x32xbf16>, vector<32x32xbf16>, vector<2x32xf32> -> vector<2x32xf32>
    %155 = arith.addf %144, %154 : vector<2x32xf32>
    %c14 = arith.constant 14 : index
    %c0_114 = arith.constant 0 : index
    %c0_115 = arith.constant 0 : index
    %156 = vector.load %arg1[%c14, %c0_114, %c0_115] : memref<16x2x4xf32, #tpu.memory_space<vmem>>, vector<1x2x4xf32>
    %157 = vector.shape_cast %156 : vector<1x2x4xf32> to vector<2x4xf32>
    %158 = arith.truncf %157 : vector<2x4xf32> to vector<2x4xbf16>
    %cst_116 = arith.constant dense<0.000000e+00> : vector<2x32xf32>
    %159 = tpu.matmul %158, %0, %cst_116 {dimension_numbers = #tpu.dot_dimension_numbers<[1], [0], [0], [1], [0, 0, 1, 1], [], []>} : vector<2x4xbf16>, vector<4x32xbf16>, vector<2x32xf32> -> vector<2x32xf32>
    %cst_117 = arith.constant 0.000000e+00 : f32
    %160 = vector.broadcast %cst_117 : f32 to vector<2x32xf32>
    %161 = arith.maximumf %159, %160 : vector<2x32xf32>
    %162 = arith.truncf %161 : vector<2x32xf32> to vector<2x32xbf16>
    %c14_118 = arith.constant 14 : index
    %c0_119 = arith.constant 0 : index
    %c0_120 = arith.constant 0 : index
    %163 = vector.load %arg3[%c14_118, %c0_119, %c0_120] : memref<16x32x32xbf16, #tpu.memory_space<vmem>>, vector<1x32x32xbf16>
    %164 = vector.shape_cast %163 : vector<1x32x32xbf16> to vector<32x32xbf16>
    %cst_121 = arith.constant dense<0.000000e+00> : vector<2x32xf32>
    %165 = tpu.matmul %162, %164, %cst_121 {dimension_numbers = #tpu.dot_dimension_numbers<[1], [0], [0], [1], [0, 0, 1, 1], [], []>} : vector<2x32xbf16>, vector<32x32xbf16>, vector<2x32xf32> -> vector<2x32xf32>
    %166 = arith.addf %155, %165 : vector<2x32xf32>
    %c15 = arith.constant 15 : index
    %c0_122 = arith.constant 0 : index
    %c0_123 = arith.constant 0 : index
    %167 = vector.load %arg1[%c15, %c0_122, %c0_123] : memref<16x2x4xf32, #tpu.memory_space<vmem>>, vector<1x2x4xf32>
    %168 = vector.shape_cast %167 : vector<1x2x4xf32> to vector<2x4xf32>
    %169 = arith.truncf %168 : vector<2x4xf32> to vector<2x4xbf16>
    %cst_124 = arith.constant dense<0.000000e+00> : vector<2x32xf32>
    %170 = tpu.matmul %169, %0, %cst_124 {dimension_numbers = #tpu.dot_dimension_numbers<[1], [0], [0], [1], [0, 0, 1, 1], [], []>} : vector<2x4xbf16>, vector<4x32xbf16>, vector<2x32xf32> -> vector<2x32xf32>
    %cst_125 = arith.constant 0.000000e+00 : f32
    %171 = vector.broadcast %cst_125 : f32 to vector<2x32xf32>
    %172 = arith.maximumf %170, %171 : vector<2x32xf32>
    %173 = arith.truncf %172 : vector<2x32xf32> to vector<2x32xbf16>
    %c15_126 = arith.constant 15 : index
    %c0_127 = arith.constant 0 : index
    %c0_128 = arith.constant 0 : index
    %174 = vector.load %arg3[%c15_126, %c0_127, %c0_128] : memref<16x32x32xbf16, #tpu.memory_space<vmem>>, vector<1x32x32xbf16>
    %175 = vector.shape_cast %174 : vector<1x32x32xbf16> to vector<32x32xbf16>
    %cst_129 = arith.constant dense<0.000000e+00> : vector<2x32xf32>
    %176 = tpu.matmul %173, %175, %cst_129 {dimension_numbers = #tpu.dot_dimension_numbers<[1], [0], [0], [1], [0, 0, 1, 1], [], []>} : vector<2x32xbf16>, vector<32x32xbf16>, vector<2x32xf32> -> vector<2x32xf32>
    %177 = arith.addf %166, %176 : vector<2x32xf32>
    %c0_130 = arith.constant 0 : index
    %c0_131 = arith.constant 0 : index
    %178 = vector.load %arg4[%c0_130, %c0_131] : memref<1x32xf32, #tpu.memory_space<vmem>>, vector<1x32xf32>
    %179 = vector.broadcast %178 : vector<1x32xf32> to vector<2x32xf32>
    %180 = arith.addf %177, %179 : vector<2x32xf32>
    %cst_132 = arith.constant 0.000000e+00 : f32
    %181 = vector.broadcast %cst_132 : f32 to vector<2x32xf32>
    %182 = arith.maximumf %180, %181 : vector<2x32xf32>
    %183 = arith.truncf %182 : vector<2x32xf32> to vector<2x32xbf16>
    %c0_133 = arith.constant 0 : index
    %c0_134 = arith.constant 0 : index
    %184 = vector.load %arg5[%c0_133, %c0_134] : memref<32x384xbf16, #tpu.memory_space<vmem>>, vector<32x384xbf16>
    %cst_135 = arith.constant dense<0.000000e+00> : vector<2x384xf32>
    %185 = tpu.matmul %183, %184, %cst_135 {dimension_numbers = #tpu.dot_dimension_numbers<[1], [0], [0], [1], [0, 0, 1, 1], [], []>} : vector<2x32xbf16>, vector<32x384xbf16>, vector<2x384xf32> -> vector<2x384xf32>
    %c0_136 = arith.constant 0 : index
    %c0_137 = arith.constant 0 : index
    %186 = vector.load %arg6[%c0_136, %c0_137] : memref<1x384xf32, #tpu.memory_space<vmem>>, vector<1x384xf32>
    %187 = vector.broadcast %186 : vector<1x384xf32> to vector<2x384xf32>
    %188 = arith.addf %185, %187 : vector<2x384xf32>
    %189 = vector.extract_strided_slice %188 {offsets = [0, 0], sizes = [2, 128], strides = [1, 1]} : vector<2x384xf32> to vector<2x128xf32>
    %190 = arith.negf %189 : vector<2x128xf32>
    %191 = math.exp %190 : vector<2x128xf32>
    %cst_138 = arith.constant 1.000000e+00 : f32
    %192 = vector.broadcast %cst_138 : f32 to vector<2x128xf32>
    %193 = arith.addf %192, %191 : vector<2x128xf32>
    %194 = arith.divf %192, %193 : vector<2x128xf32>
    %195 = vector.extract_strided_slice %188 {offsets = [0, 128], sizes = [2, 128], strides = [1, 1]} : vector<2x384xf32> to vector<2x128xf32>
    %196 = arith.negf %195 : vector<2x128xf32>
    %197 = math.exp %196 : vector<2x128xf32>
    %cst_139 = arith.constant 1.000000e+00 : f32
    %198 = vector.broadcast %cst_139 : f32 to vector<2x128xf32>
    %199 = arith.addf %198, %197 : vector<2x128xf32>
    %200 = arith.divf %198, %199 : vector<2x128xf32>
    %201 = vector.extract_strided_slice %188 {offsets = [0, 256], sizes = [2, 128], strides = [1, 1]} : vector<2x384xf32> to vector<2x128xf32>
    %c0_140 = arith.constant 0 : index
    %c0_141 = arith.constant 0 : index
    %202 = vector.load %arg7[%c0_140, %c0_141] : memref<1x128xf32, #tpu.memory_space<vmem>>, vector<1x128xf32>
    %203 = vector.broadcast %202 : vector<1x128xf32> to vector<2x128xf32>
    %204 = arith.mulf %194, %203 : vector<2x128xf32>
    %205 = arith.addf %201, %204 : vector<2x128xf32>
    %206 = math.tanh %205 : vector<2x128xf32>
    %cst_142 = arith.constant 1.000000e+00 : f32
    %207 = vector.broadcast %cst_142 : f32 to vector<2x128xf32>
    %208 = arith.subf %207, %200 : vector<2x128xf32>
    %209 = arith.mulf %208, %206 : vector<2x128xf32>
    %c0_143 = arith.constant 0 : index
    %c0_144 = arith.constant 0 : index
    %210 = vector.load %arg11[%c0_143, %c0_144] : memref<2x128xf32, #tpu.memory_space<vmem>>, vector<2x128xf32>
    tpu.vector_store %arg11[%c0_143, %c0_144], %209 {strides = array<i32>} : memref<2x128xf32, #tpu.memory_space<vmem>>, vector<2x128xf32>,
    %211 = arith.truncf %209 : vector<2x128xf32> to vector<2x128xbf16>
    %c0_145 = arith.constant 0 : index
    %c0_146 = arith.constant 0 : index
    %212 = vector.load %arg8[%c0_145, %c0_146] : memref<128x128xbf16, #tpu.memory_space<vmem>>, vector<128x128xbf16>
    %cst_147 = arith.constant dense<0.000000e+00> : vector<2x128xf32>
    %213 = tpu.matmul %211, %212, %cst_147 {dimension_numbers = #tpu.dot_dimension_numbers<[1], [0], [0], [1], [0, 0, 1, 1], [], []>} : vector<2x128xbf16>, vector<128x128xbf16>, vector<2x128xf32> -> vector<2x128xf32>
    %c0_148 = arith.constant 0 : index
    %c0_149 = arith.constant 0 : index
    %214 = vector.load %arg9[%c0_148, %c0_149] : memref<1x128xf32, #tpu.memory_space<vmem>>, vector<1x128xf32>
    %215 = vector.broadcast %214 : vector<1x128xf32> to vector<2x128xf32>
    %216 = arith.addf %213, %215 : vector<2x128xf32>
    %217 = arith.negf %216 : vector<2x128xf32>
    %218 = math.exp %217 : vector<2x128xf32>
    %cst_150 = arith.constant 1.000000e+00 : f32
    %219 = vector.broadcast %cst_150 : f32 to vector<2x128xf32>
    %220 = arith.addf %219, %218 : vector<2x128xf32>
    %221 = arith.divf %219, %220 : vector<2x128xf32>
    %c0_151 = arith.constant 0 : index
    %c0_152 = arith.constant 0 : index
    %222 = vector.load %arg10[%c0_151, %c0_152] : memref<2x128xf32, #tpu.memory_space<vmem>>, vector<2x128xf32>
    tpu.vector_store %arg10[%c0_151, %c0_152], %221 {strides = array<i32>} : memref<2x128xf32, #tpu.memory_space<vmem>>, vector<2x128xf32>,
    return
  }
  func.func @transform_0(%arg0: i32) -> (i32, i32, i32) {
    %c0_i32 = arith.constant 0 : i32
    %c0_i32_0 = arith.constant 0 : i32
    %c0_i32_1 = arith.constant 0 : i32
    return %c0_i32, %arg0, %c0_i32_0 : i32, i32, i32
  }
  func.func @transform_1(%arg0: i32) -> (i32, i32) {
    %c0_i32 = arith.constant 0 : i32
    %c0_i32_0 = arith.constant 0 : i32
    %c0_i32_1 = arith.constant 0 : i32
    return %c0_i32, %c0_i32_0 : i32, i32
  }
  func.func @transform_2(%arg0: i32) -> (i32, i32, i32) {
    %c0_i32 = arith.constant 0 : i32
    %c0_i32_0 = arith.constant 0 : i32
    %c0_i32_1 = arith.constant 0 : i32
    %c0_i32_2 = arith.constant 0 : i32
    return %c0_i32, %c0_i32_0, %c0_i32_1 : i32, i32, i32
  }
  func.func @transform_3(%arg0: i32) -> (i32, i32) {
    %c0_i32 = arith.constant 0 : i32
    %c0_i32_0 = arith.constant 0 : i32
    %c0_i32_1 = arith.constant 0 : i32
    return %c0_i32, %c0_i32_0 : i32, i32
  }
  func.func @transform_4(%arg0: i32) -> (i32, i32) {
    %c0_i32 = arith.constant 0 : i32
    %c0_i32_0 = arith.constant 0 : i32
    %c0_i32_1 = arith.constant 0 : i32
    return %c0_i32, %c0_i32_0 : i32, i32
  }
  func.func @transform_5(%arg0: i32) -> (i32, i32) {
    %c0_i32 = arith.constant 0 : i32
    %c0_i32_0 = arith.constant 0 : i32
    %c0_i32_1 = arith.constant 0 : i32
    return %c0_i32, %c0_i32_0 : i32, i32
  }
  func.func @transform_6(%arg0: i32) -> (i32, i32) {
    %c0_i32 = arith.constant 0 : i32
    %c0_i32_0 = arith.constant 0 : i32
    %c0_i32_1 = arith.constant 0 : i32
    return %c0_i32, %c0_i32_0 : i32, i32
  }
  func.func @transform_7(%arg0: i32) -> (i32, i32) {
    %c0_i32 = arith.constant 0 : i32
    %c0_i32_0 = arith.constant 0 : i32
    %c0_i32_1 = arith.constant 0 : i32
    return %c0_i32, %c0_i32_0 : i32, i32
  }
  func.func @transform_8(%arg0: i32) -> (i32, i32) {
    %c0_i32 = arith.constant 0 : i32
    %c0_i32_0 = arith.constant 0 : i32
    %c0_i32_1 = arith.constant 0 : i32
    return %c0_i32, %c0_i32_0 : i32, i32
  }
  func.func @transform_9(%arg0: i32) -> (i32, i32) {
    %c0_i32 = arith.constant 0 : i32
    %c0_i32_0 = arith.constant 0 : i32
    return %arg0, %c0_i32 : i32, i32
  }
  func.func @transform_10(%arg0: i32) -> (i32, i32) {
    %c0_i32 = arith.constant 0 : i32
    %c0_i32_0 = arith.constant 0 : i32
    return %arg0, %c0_i32 : i32, i32
  }
}

</mosaic_0001>

<llo_original>
// kernel: tpu_custom_call.1
$region0: #{tpu_custom_call.1}
  #allocation0 [shape = 'u32[]', space=smem, size = 0x4, offset = 0x4, fixed_abs, tag = 'smem constant byte address 0x4 - core index']
  #allocation1 [shape = 'u32[144,128]{1,0:T(1,128)}', space=vmem, size = 0x12000, scoped, tag = 'internal scratch']
  %s0 = inlined_call_operand.hbm [shape: f32[16,2,4], index: 0, kind: input, shape index: {}]
  %s1 = inlined_call_operand.hbm [shape: bf16[4,32], index: 1, kind: input, shape index: {}]
  %s2 = inlined_call_operand.hbm [shape: bf16[16,32,32], index: 2, kind: input, shape index: {}]
  %s3 = inlined_call_operand.hbm [shape: f32[1,32], index: 3, kind: input, shape index: {}]
  %s4 = inlined_call_operand.hbm [shape: bf16[32,384], index: 4, kind: input, shape index: {}]
  %s5 = inlined_call_operand.hbm [shape: f32[1,384], index: 5, kind: input, shape index: {}]
  %s6 = inlined_call_operand.hbm [shape: f32[1,128], index: 6, kind: input, shape index: {}]
  %s7 = inlined_call_operand.hbm [shape: bf16[128,128], index: 7, kind: input, shape index: {}]
  %s8 = inlined_call_operand.hbm [shape: f32[1,128], index: 8, kind: input, shape index: {}]
  %s9 = inlined_call_operand.hbm [shape: f32[2,128], index: 9, kind: output, shape index: {0}]
  %s10 = inlined_call_operand.hbm [shape: f32[2,128], index: 10, kind: output, shape index: {1}]
  %11 = xla_tuple %s9, %s10
  %s12 = sld [smem:[#allocation0]]
  $region90: #{tpu_custom_call.1} parent=0
    _
  %s14 = ssub.s32 1, %s12
  %s15 = scalar_select 0, %s14, %s12
  $region1: #{tpu_custom_call.1} parent=0
    #allocation2 [shape = 'u8[16384]{0}', space=vmem, size = 0x4000, scoped, tag = 'input window, operand 0, single buffered']
    #allocation3 [shape = 's32[1]{0}', space=sflag, size = 0x4, scoped, tag = 'scoped memory for tpu_custom_call.1']
    #allocation4 [shape = 's32[1]{0}', space=sflag, size = 0x4, scoped, tag = 'scoped memory for tpu_custom_call.1']
    #allocation5 [shape = 'u8[1024]{0}', space=vmem, size = 0x400, scoped, tag = 'input window, operand 1, single buffered']
    #allocation6 [shape = 's32[1]{0}', space=sflag, size = 0x4, scoped, tag = 'scoped memory for tpu_custom_call.1']
    #allocation7 [shape = 'u8[131072]{0}', space=vmem, size = 0x20000, scoped, tag = 'input window, operand 2, single buffered']
    #allocation8 [shape = 'u8[512]{0}', space=vmem, size = 0x400, scoped, tag = 'input window, operand 3, single buffered']
    #allocation9 [shape = 's32[1]{0}', space=sflag, size = 0x4, scoped, tag = 'scoped memory for tpu_custom_call.1']
    #allocation10 [shape = 'u8[24576]{0}', space=vmem, size = 0x6000, scoped, tag = 'input window, operand 4, single buffered']
    #allocation11 [shape = 'u8[1536]{0}', space=vmem, size = 0x800, scoped, tag = 'input window, operand 5, single buffered']
    #allocation12 [shape = 's32[1]{0}', space=sflag, size = 0x4, scoped, tag = 'scoped memory for tpu_custom_call.1']
    #allocation13 [shape = 'u8[512]{0}', space=vmem, size = 0x400, scoped, tag = 'input window, operand 6, single buffered']
    #allocation14 [shape = 'u8[32768]{0}', space=vmem, size = 0x8000, scoped, tag = 'input window, operand 7, single buffered']
    #allocation15 [shape = 's32[1]{0}', space=sflag, size = 0x4, scoped, tag = 'scoped memory for tpu_custom_call.1']
    #allocation16 [shape = 'u8[512]{0}', space=vmem, size = 0x400, scoped, tag = 'input window, operand 8, single buffered']
    #allocation17 [shape = 'u8[1024]{0}', space=vmem, size = 0x400, scoped, tag = 'output window, operand 0, single buffered']
    #allocation18 [shape = 'u8[1024]{0}', space=vmem, size = 0x400, scoped, tag = 'output window, operand 1, single buffered']
    #allocation19 [shape = 's32[1]{0}', space=sflag, size = 0x4, scoped, tag = 'scoped memory for tpu_custom_call.1']
    %16 = vsyncpa [#allocation3], 0
    %17 = vsyncpa [#allocation6], 0
    %18 = vsyncpa [#allocation9], 0
    %19 = vsyncpa [#allocation12], 0
    %20 = vsyncpa [#allocation15], 0
    %21 = vsyncpa [#allocation4], 0
    %22 = vsyncpa [#allocation19], 0
    // Predicated region
    $region2: #{tpu_custom_call.1} parent=1 // pred_check
      _
    $region3: #{tpu_custom_call.1} parent=1 // pred_check_branch
      %24 = sbr.rel (0) target = $region5
    $region4: #{tpu_custom_call.1} parent=1 // pred_region
      %s26 = ssub.s32 512, 512
      %27 = vsyncadd [#allocation3], %s26
      %s28 = sshll.u32 [#allocation2], 4
      %s29 = int_to_ptr.vmem [resolvable:$true] %s28
      %34 = dma.hbm_to_vmem [thread:$0]  %s0, 512, %s29, [#allocation3], 32, 32, 2
    $region5: #{tpu_custom_call.1} parent=1 // pred_fallthru
      _
    // Predicated region
    $region6: #{tpu_custom_call.1} parent=1 // pred_check
      _
    $region7: #{tpu_custom_call.1} parent=1 // pred_check_branch
      %36 = sbr.rel (0) target = $region9
    $region8: #{tpu_custom_call.1} parent=1 // pred_region
      %s38 = ssub.s32 32, 32
      %39 = vsyncadd [#allocation6], %s38
      %s41 = sshll.u32 [#allocation5], 4
      %s42 = int_to_ptr.vmem [resolvable:$true] %s41
      %44 = dma.hbm_to_vmem [thread:$0]  %s1, 32, %s42, [#allocation6]
    $region9: #{tpu_custom_call.1} parent=1 // pred_fallthru
      _
    // Predicated region
    $region10: #{tpu_custom_call.1} parent=1 // pred_check
      _
    $region11: #{tpu_custom_call.1} parent=1 // pred_check_branch
      %46 = sbr.rel (0) target = $region13
    $region12: #{tpu_custom_call.1} parent=1 // pred_region
      %s48 = ssub.s32 4096, 4096
      %49 = vsyncadd [#allocation6], %s48
      %s50 = sshll.u32 [#allocation7], 4
      %s51 = int_to_ptr.vmem [resolvable:$true] %s50
      %56 = dma.hbm_to_vmem [thread:$0]  %s2, 4096, %s51, [#allocation6], 64, 64, 4
    $region13: #{tpu_custom_call.1} parent=1 // pred_fallthru
      _
    // Predicated region
    $region14: #{tpu_custom_call.1} parent=1 // pred_check
      _
    $region15: #{tpu_custom_call.1} parent=1 // pred_check_branch
      %58 = sbr.rel (0) target = $region17
    $region16: #{tpu_custom_call.1} parent=1 // pred_region
      %s60 = ssub.s32 16, 16
      %61 = vsyncadd [#allocation9], %s60
      %s63 = sshll.u32 [#allocation8], 4
      %s64 = int_to_ptr.vmem [resolvable:$true] %s63
      %66 = dma.hbm_to_vmem [thread:$0]  %s3, 16, %s64, [#allocation9]
    $region17: #{tpu_custom_call.1} parent=1 // pred_fallthru
      _
    // Predicated region
    $region18: #{tpu_custom_call.1} parent=1 // pred_check
      _
    $region19: #{tpu_custom_call.1} parent=1 // pred_check_branch
      %68 = sbr.rel (0) target = $region21
    $region20: #{tpu_custom_call.1} parent=1 // pred_region
      %s70 = ssub.s32 768, 768
      %71 = vsyncadd [#allocation9], %s70
      %s72 = sshll.u32 [#allocation10], 4
      %s73 = int_to_ptr.vmem [resolvable:$true] %s72
      %78 = dma.hbm_to_vmem [thread:$0]  %s4, 768, %s73, [#allocation9], 192, 192, 12
    $region21: #{tpu_custom_call.1} parent=1 // pred_fallthru
      _
    // Predicated region
    $region22: #{tpu_custom_call.1} parent=1 // pred_check
      _
    $region23: #{tpu_custom_call.1} parent=1 // pred_check_branch
      %80 = sbr.rel (0) target = $region25
    $region24: #{tpu_custom_call.1} parent=1 // pred_region
      %s82 = ssub.s32 48, 48
      %83 = vsyncadd [#allocation12], %s82
      %s85 = sshll.u32 [#allocation11], 4
      %s86 = int_to_ptr.vmem [resolvable:$true] %s85
      %88 = dma.hbm_to_vmem [thread:$0]  %s5, 48, %s86, [#allocation12]
    $region25: #{tpu_custom_call.1} parent=1 // pred_fallthru
      _
    // Predicated region
    $region26: #{tpu_custom_call.1} parent=1 // pred_check
      _
    $region27: #{tpu_custom_call.1} parent=1 // pred_check_branch
      %90 = sbr.rel (0) target = $region29
    $region28: #{tpu_custom_call.1} parent=1 // pred_region
      %s92 = ssub.s32 16, 16
      %93 = vsyncadd [#allocation12], %s92
      %s95 = sshll.u32 [#allocation13], 4
      %s96 = int_to_ptr.vmem [resolvable:$true] %s95
      %98 = dma.hbm_to_vmem [thread:$0]  %s6, 16, %s96, [#allocation12]
    $region29: #{tpu_custom_call.1} parent=1 // pred_fallthru
      _
    // Predicated region
    $region30: #{tpu_custom_call.1} parent=1 // pred_check
      _
    $region31: #{tpu_custom_call.1} parent=1 // pred_check_branch
      %100 = sbr.rel (0) target = $region33
    $region32: #{tpu_custom_call.1} parent=1 // pred_region
      %s102 = ssub.s32 1024, 1024
      %103 = vsyncadd [#allocation15], %s102
      %s104 = sshll.u32 [#allocation14], 4
      %s105 = int_to_ptr.vmem [resolvable:$true] %s104
      %110 = dma.hbm_to_vmem [thread:$0]  %s7, 1024, %s105, [#allocation15], 64, 64, 4
    $region33: #{tpu_custom_call.1} parent=1 // pred_fallthru
      _
    // Predicated region
    $region34: #{tpu_custom_call.1} parent=1 // pred_check
      _
    $region35: #{tpu_custom_call.1} parent=1 // pred_check_branch
      %112 = sbr.rel (0) target = $region37
    $region36: #{tpu_custom_call.1} parent=1 // pred_region
      %s114 = ssub.s32 16, 16
      %115 = vsyncadd [#allocation15], %s114
      %s117 = sshll.u32 [#allocation16], 4
      %s118 = int_to_ptr.vmem [resolvable:$true] %s117
      %120 = dma.hbm_to_vmem [thread:$0]  %s8, 16, %s118, [#allocation15]
    $region37: #{tpu_custom_call.1} parent=1 // pred_fallthru
      _
    // Predicated region
    $region38: #{tpu_custom_call.1} parent=1 // pred_check
      _
    $region39: #{tpu_custom_call.1} parent=1 // pred_check_branch
      %122 = sbr.rel (0) target = $region41
    $region40: #{tpu_custom_call.1} parent=1 // pred_region
      %123 = dma.done [#allocation3], 512
    $region41: #{tpu_custom_call.1} parent=1 // pred_fallthru
      _
    // Predicated region
    $region42: #{tpu_custom_call.1} parent=1 // pred_check
      _
    $region43: #{tpu_custom_call.1} parent=1 // pred_check_branch
      %125 = sbr.rel (0) target = $region45
    $region44: #{tpu_custom_call.1} parent=1 // pred_region
      %126 = dma.done [#allocation6], 32
    $region45: #{tpu_custom_call.1} parent=1 // pred_fallthru
      _
    // Predicated region
    $region46: #{tpu_custom_call.1} parent=1 // pred_check
      _
    $region47: #{tpu_custom_call.1} parent=1 // pred_check_branch
      %128 = sbr.rel (0) target = $region49
    $region48: #{tpu_custom_call.1} parent=1 // pred_region
      %129 = dma.done [#allocation6], 4096
    $region49: #{tpu_custom_call.1} parent=1 // pred_fallthru
      _
    // Predicated region
    $region50: #{tpu_custom_call.1} parent=1 // pred_check
      _
    $region51: #{tpu_custom_call.1} parent=1 // pred_check_branch
      %131 = sbr.rel (0) target = $region53
    $region52: #{tpu_custom_call.1} parent=1 // pred_region
      %132 = dma.done [#allocation9], 16
    $region53: #{tpu_custom_call.1} parent=1 // pred_fallthru
      _
    // Predicated region
    $region54: #{tpu_custom_call.1} parent=1 // pred_check
      _
    $region55: #{tpu_custom_call.1} parent=1 // pred_check_branch
      %134 = sbr.rel (0) target = $region57
    $region56: #{tpu_custom_call.1} parent=1 // pred_region
      %135 = dma.done [#allocation9], 768
    $region57: #{tpu_custom_call.1} parent=1 // pred_fallthru
      _
    // Predicated region
    $region58: #{tpu_custom_call.1} parent=1 // pred_check
      _
    $region59: #{tpu_custom_call.1} parent=1 // pred_check_branch
      %137 = sbr.rel (0) target = $region61
    $region60: #{tpu_custom_call.1} parent=1 // pred_region
      %138 = dma.done [#allocation12], 48
    $region61: #{tpu_custom_call.1} parent=1 // pred_fallthru
      _
    // Predicated region
    $region62: #{tpu_custom_call.1} parent=1 // pred_check
      _
    $region63: #{tpu_custom_call.1} parent=1 // pred_check_branch
      %140 = sbr.rel (0) target = $region65
    $region64: #{tpu_custom_call.1} parent=1 // pred_region
      %141 = dma.done [#allocation12], 16
    $region65: #{tpu_custom_call.1} parent=1 // pred_fallthru
      _
    // Predicated region
    $region66: #{tpu_custom_call.1} parent=1 // pred_check
      _
    $region67: #{tpu_custom_call.1} parent=1 // pred_check_branch
      %143 = sbr.rel (0) target = $region69
    $region68: #{tpu_custom_call.1} parent=1 // pred_region
      %144 = dma.done [#allocation15], 1024
    $region69: #{tpu_custom_call.1} parent=1 // pred_fallthru
      _
    // Predicated region
    $region70: #{tpu_custom_call.1} parent=1 // pred_check
      _
    $region71: #{tpu_custom_call.1} parent=1 // pred_check_branch
      %146 = sbr.rel (0) target = $region73
    $region72: #{tpu_custom_call.1} parent=1 // pred_region
      %147 = dma.done [#allocation15], 16
    $region73: #{tpu_custom_call.1} parent=1 // pred_fallthru
      _
    %v149 = vld [vmem:[#allocation5] sm:$0x3]
    %v150 = vld [vmem:[#allocation2] sm:$0x3]
    %v151 = vpack.c.bf16 %v150, %v150
    %vm152 = vcmask 31744
    %v154 = vsel %vm152, %v151, 0
    %vm156 = vcmask 1041408
    %v158 = vsel %vm156, %v149, 0
    %160 = vmatprep.subr.bf16.mxu0 0
    %161 = vmatpush1.bf16.msra.mxu0 %v158
    %162 = vmatprep.subr.bf16.mxu0 0
    %163 = vmatpush1.bf16.msra.mxu0 0
    %164 = vmatprep.subr.bf16.mxu0 0
    %165 = vmatpush1.bf16.msra.mxu0 0
    %166 = vmatprep.subr.bf16.mxu0 0
    %167 = vmatpush1.bf16.msra.mxu0 0
    %168 = vmatprep.subr.bf16.mxu0 0
    %169 = vmatpush1.bf16.msra.mxu0 0
    %170 = vmatprep.subr.bf16.mxu0 0
    %171 = vmatpush1.bf16.msra.mxu0 0
    %172 = vmatprep.subr.bf16.mxu0 0
    %173 = vmatpush1.bf16.msra.mxu0 0
    %174 = vmatprep.subr.bf16.mxu0 0
    %175 = vmatpush1.bf16.msra.mxu0 0
    %176 = vmatprep.subr.bf16.mxu0 0
    %177 = vmatpush1.bf16.msra.mxu0 0
    %178 = vmatprep.subr.bf16.mxu0 0
    %179 = vmatpush1.bf16.msra.mxu0 0
    %180 = vmatprep.subr.bf16.mxu0 0
    %181 = vmatpush1.bf16.msra.mxu0 0
    %182 = vmatprep.subr.bf16.mxu0 0
    %183 = vmatpush1.bf16.msra.mxu0 0
    %184 = vmatprep.subr.bf16.mxu0 0
    %185 = vmatpush1.bf16.msra.mxu0 0
    %186 = vmatprep.subr.bf16.mxu0 0
    %187 = vmatpush1.bf16.msra.mxu0 0
    %188 = vmatprep.subr.bf16.mxu0 0
    %189 = vmatpush1.bf16.msra.mxu0 0
    %190 = vmatprep.subr.bf16.mxu0 0
    %191 = vmatpush1.bf16.msra.mxu0 0
    %192 = vmatprep.mubr.bf16.mxu0 0
    %193 = vmatmul.mubr.bf16.gmra.mrb[0].mxu0 %v154
    %v194 = vpop.f32.mrb[0].mxu0
    %v195 = vadd.f32 0.0, %v194
    %v196 = vpop.f32.mrb[0].mxu0
    %v197 = vpop.f32.mrb[0].mxu0
    %v198 = vpop.f32.mrb[0].mxu0
    %199 = vdwg.mxu0
    %v200 = vmax.f32 %v195, 0.0
    %v201 = vpack.c.bf16 %v200, %v200
    %v202 = vld [vmem:[#allocation7] sm:$0xf]
    %v203 = vld [vmem:[#allocation7 + $0x4] sm:$0xf]
    %v204 = vld [vmem:[#allocation7 + $0x8] sm:$0xf]
    %v205 = vld [vmem:[#allocation7 + $0xc] sm:$0xf]
    %s206 = scalar_lea.vmem [#allocation2], 2
    %v207 = vld [vmem:[%s206] sm:$0x3]
    %v208 = vpack.c.bf16 %v207, %v207
    %v210 = vsel %vm152, %v208, 0
    %212 = vmatprep.subr.bf16.mxu0 0
    %213 = vmatpush1.bf16.msra.mxu0 %v158
    %214 = vmatprep.subr.bf16.mxu0 0
    %215 = vmatpush1.bf16.msra.mxu0 0
    %216 = vmatprep.subr.bf16.mxu0 0
    %217 = vmatpush1.bf16.msra.mxu0 0
    %218 = vmatprep.subr.bf16.mxu0 0
    %219 = vmatpush1.bf16.msra.mxu0 0
    %220 = vmatprep.subr.bf16.mxu0 0
    %221 = vmatpush1.bf16.msra.mxu0 0
    %222 = vmatprep.subr.bf16.mxu0 0
    %223 = vmatpush1.bf16.msra.mxu0 0
    %224 = vmatprep.subr.bf16.mxu0 0
    %225 = vmatpush1.bf16.msra.mxu0 0
    %226 = vmatprep.subr.bf16.mxu0 0
    %227 = vmatpush1.bf16.msra.mxu0 0
    %228 = vmatprep.subr.bf16.mxu0 0
    %229 = vmatpush1.bf16.msra.mxu0 0
    %230 = vmatprep.subr.bf16.mxu0 0
    %231 = vmatpush1.bf16.msra.mxu0 0
    %232 = vmatprep.subr.bf16.mxu0 0
    %233 = vmatpush1.bf16.msra.mxu0 0
    %234 = vmatprep.subr.bf16.mxu0 0
    %235 = vmatpush1.bf16.msra.mxu0 0
    %236 = vmatprep.subr.bf16.mxu0 0
    %237 = vmatpush1.bf16.msra.mxu0 0
    %238 = vmatprep.subr.bf16.mxu0 0
    %239 = vmatpush1.bf16.msra.mxu0 0
    %240 = vmatprep.subr.bf16.mxu0 0
    %241 = vmatpush1.bf16.msra.mxu0 0
    %242 = vmatprep.subr.bf16.mxu0 0
    %243 = vmatpush1.bf16.msra.mxu0 0
    %244 = vmatprep.mubr.bf16.mxu0 0
    %245 = vmatmul.mubr.bf16.gmra.mrb[0].mxu0 %v210
    %v246 = vpop.f32.mrb[0].mxu0
    %v247 = vadd.f32 0.0, %v246
    %v248 = vpop.f32.mrb[0].mxu0
    %v249 = vpop.f32.mrb[0].mxu0
    %v250 = vpop.f32.mrb[0].mxu0
    %251 = vdwg.mxu0
    %v252 = vmax.f32 %v247, 0.0
    %v253 = vpack.c.bf16 %v252, %v252
    %s254 = scalar_lea.vmem [#allocation7], 16
    %v255 = vld [vmem:[%s254] sm:$0xf]
    %v256 = vld [vmem:[%s254 + $0x4] sm:$0xf]
    %v257 = vld [vmem:[%s254 + $0x8] sm:$0xf]
    %v258 = vld [vmem:[%s254 + $0xc] sm:$0xf]
    %v263 = vunpack.c.l.b16 %v255
    %v264 = vunpack.c.l.b16 %v256
    %v265 = vunpack.c.l.b16 %v257
    %v266 = vunpack.c.l.b16 %v258
    %v267 = vpack.c.b16 %v264, %v263
    %v268 = vpack.c.b16 %v266, %v265
    %vm271 = vcmask 261120
    %v273 = vsel %vm271, %v253, 0
    %275 = vmatprep.subr.bf16.mxu0 0
    %276 = vmatpush1.bf16.msra.mxu0 %v267
    %277 = vmatprep.subr.bf16.mxu0 0
    %278 = vmatpush1.bf16.msra.mxu0 %v268
    %279 = vmatprep.subr.bf16.mxu0 0
    %280 = vmatpush1.bf16.msra.mxu0 0
    %281 = vmatprep.subr.bf16.mxu0 0
    %282 = vmatpush1.bf16.msra.mxu0 0
    %283 = vmatprep.subr.bf16.mxu0 0
    %284 = vmatpush1.bf16.msra.mxu0 0
    %285 = vmatprep.subr.bf16.mxu0 0
    %286 = vmatpush1.bf16.msra.mxu0 0
    %287 = vmatprep.subr.bf16.mxu0 0
    %288 = vmatpush1.bf16.msra.mxu0 0
    %289 = vmatprep.subr.bf16.mxu0 0
    %290 = vmatpush1.bf16.msra.mxu0 0
    %291 = vmatprep.subr.bf16.mxu0 0
    %292 = vmatpush1.bf16.msra.mxu0 0
    %293 = vmatprep.subr.bf16.mxu0 0
    %294 = vmatpush1.bf16.msra.mxu0 0
    %295 = vmatprep.subr.bf16.mxu0 0
    %296 = vmatpush1.bf16.msra.mxu0 0
    %297 = vmatprep.subr.bf16.mxu0 0
    %298 = vmatpush1.bf16.msra.mxu0 0
    %299 = vmatprep.subr.bf16.mxu0 0
    %300 = vmatpush1.bf16.msra.mxu0 0
    %301 = vmatprep.subr.bf16.mxu0 0
    %302 = vmatpush1.bf16.msra.mxu0 0
    %303 = vmatprep.subr.bf16.mxu0 0
    %304 = vmatpush1.bf16.msra.mxu0 0
    %305 = vmatprep.subr.bf16.mxu0 0
    %306 = vmatpush1.bf16.msra.mxu0 0
    %307 = vmatprep.mubr.bf16.mxu0 0
    %308 = vmatmul.mubr.bf16.gmra.mrb[0].mxu0 %v273
    %v309 = vpop.f32.mrb[0].mxu0
    %v310 = vadd.f32 0.0, %v309
    %v311 = vpop.f32.mrb[0].mxu0
    %v312 = vpop.f32.mrb[0].mxu0
    %v313 = vpop.f32.mrb[0].mxu0
    %314 = vdwg.mxu0
    %v319 = vunpack.c.l.b16 %v202
    %v320 = vunpack.c.l.b16 %v203
    %v321 = vunpack.c.l.b16 %v204
    %v322 = vunpack.c.l.b16 %v205
    %v323 = vpack.c.b16 %v320, %v319
    %v324 = vpack.c.b16 %v322, %v321
    %v328 = vsel %vm271, %v201, 0
    %330 = vmatprep.subr.bf16.mxu0 0
    %331 = vmatpush1.bf16.msra.mxu0 %v323
    %332 = vmatprep.subr.bf16.mxu0 0
    %333 = vmatpush1.bf16.msra.mxu0 %v324
    %334 = vmatprep.subr.bf16.mxu0 0
    %335 = vmatpush1.bf16.msra.mxu0 0
    %336 = vmatprep.subr.bf16.mxu0 0
    %337 = vmatpush1.bf16.msra.mxu0 0
    %338 = vmatprep.subr.bf16.mxu0 0
    %339 = vmatpush1.bf16.msra.mxu0 0
    %340 = vmatprep.subr.bf16.mxu0 0
    %341 = vmatpush1.bf16.msra.mxu0 0
    %342 = vmatprep.subr.bf16.mxu0 0
    %343 = vmatpush1.bf16.msra.mxu0 0
    %344 = vmatprep.subr.bf16.mxu0 0
    %345 = vmatpush1.bf16.msra.mxu0 0
    %346 = vmatprep.subr.bf16.mxu0 0
    %347 = vmatpush1.bf16.msra.mxu0 0
    %348 = vmatprep.subr.bf16.mxu0 0
    %349 = vmatpush1.bf16.msra.mxu0 0
    %350 = vmatprep.subr.bf16.mxu0 0
    %351 = vmatpush1.bf16.msra.mxu0 0
    %352 = vmatprep.subr.bf16.mxu0 0
    %353 = vmatpush1.bf16.msra.mxu0 0
    %354 = vmatprep.subr.bf16.mxu0 0
    %355 = vmatpush1.bf16.msra.mxu0 0
    %356 = vmatprep.subr.bf16.mxu0 0
    %357 = vmatpush1.bf16.msra.mxu0 0
    %358 = vmatprep.subr.bf16.mxu0 0
    %359 = vmatpush1.bf16.msra.mxu0 0
    %360 = vmatprep.subr.bf16.mxu0 0
    %361 = vmatpush1.bf16.msra.mxu0 0
    %362 = vmatprep.mubr.bf16.mxu0 0
    %363 = vmatmul.mubr.bf16.gmra.mrb[0].mxu0 %v328
    %v364 = vpop.f32.mrb[0].mxu0
    %v365 = vadd.f32 %v310, %v364
    %v366 = vpop.f32.mrb[0].mxu0
    %v367 = vpop.f32.mrb[0].mxu0
    %v368 = vpop.f32.mrb[0].mxu0
    %369 = vdwg.mxu0
    %s370 = scalar_lea.vmem [#allocation2], 4
    %v371 = vld [vmem:[%s370] sm:$0x3]
    %v372 = vpack.c.bf16 %v371, %v371
    %v374 = vsel %vm152, %v372, 0
    %376 = vmatprep.subr.bf16.mxu0 0
    %377 = vmatpush1.bf16.msra.mxu0 %v158
    %378 = vmatprep.subr.bf16.mxu0 0
    %379 = vmatpush1.bf16.msra.mxu0 0
    %380 = vmatprep.subr.bf16.mxu0 0
    %381 = vmatpush1.bf16.msra.mxu0 0
    %382 = vmatprep.subr.bf16.mxu0 0
    %383 = vmatpush1.bf16.msra.mxu0 0
    %384 = vmatprep.subr.bf16.mxu0 0
    %385 = vmatpush1.bf16.msra.mxu0 0
    %386 = vmatprep.subr.bf16.mxu0 0
    %387 = vmatpush1.bf16.msra.mxu0 0
    %388 = vmatprep.subr.bf16.mxu0 0
    %389 = vmatpush1.bf16.msra.mxu0 0
    %390 = vmatprep.subr.bf16.mxu0 0
    %391 = vmatpush1.bf16.msra.mxu0 0
    %392 = vmatprep.subr.bf16.mxu0 0
    %393 = vmatpush1.bf16.msra.mxu0 0
    %394 = vmatprep.subr.bf16.mxu0 0
    %395 = vmatpush1.bf16.msra.mxu0 0
    %396 = vmatprep.subr.bf16.mxu0 0
    %397 = vmatpush1.bf16.msra.mxu0 0
    %398 = vmatprep.subr.bf16.mxu0 0
    %399 = vmatpush1.bf16.msra.mxu0 0
    %400 = vmatprep.subr.bf16.mxu0 0
    %401 = vmatpush1.bf16.msra.mxu0 0
    %402 = vmatprep.subr.bf16.mxu0 0
    %403 = vmatpush1.bf16.msra.mxu0 0
    %404 = vmatprep.subr.bf16.mxu0 0
    %405 = vmatpush1.bf16.msra.mxu0 0
    %406 = vmatprep.subr.bf16.mxu0 0
    %407 = vmatpush1.bf16.msra.mxu0 0
    %408 = vmatprep.mubr.bf16.mxu0 0
    %409 = vmatmul.mubr.bf16.gmra.mrb[0].mxu0 %v374
    %v410 = vpop.f32.mrb[0].mxu0
    %v411 = vadd.f32 0.0, %v410
    %v412 = vpop.f32.mrb[0].mxu0
    %v413 = vpop.f32.mrb[0].mxu0
    %v414 = vpop.f32.mrb[0].mxu0
    %415 = vdwg.mxu0
    %v416 = vmax.f32 %v411, 0.0
    %v417 = vpack.c.bf16 %v416, %v416
    %s418 = scalar_lea.vmem [#allocation7], 32
    %v419 = vld [vmem:[%s418] sm:$0xf]
    %v420 = vld [vmem:[%s418 + $0x4] sm:$0xf]
    %v421 = vld [vmem:[%s418 + $0x8] sm:$0xf]
    %v422 = vld [vmem:[%s418 + $0xc] sm:$0xf]
    %v427 = vunpack.c.l.b16 %v419
    %v428 = vunpack.c.l.b16 %v420
    %v429 = vunpack.c.l.b16 %v421
    %v430 = vunpack.c.l.b16 %v422
    %v431 = vpack.c.b16 %v428, %v427
    %v432 = vpack.c.b16 %v430, %v429
    %v436 = vsel %vm271, %v417, 0
    %438 = vmatprep.subr.bf16.mxu0 0
    %439 = vmatpush1.bf16.msra.mxu0 %v431
    %440 = vmatprep.subr.bf16.mxu0 0
    %441 = vmatpush1.bf16.msra.mxu0 %v432
    %442 = vmatprep.subr.bf16.mxu0 0
    %443 = vmatpush1.bf16.msra.mxu0 0
    %444 = vmatprep.subr.bf16.mxu0 0
    %445 = vmatpush1.bf16.msra.mxu0 0
    %446 = vmatprep.subr.bf16.mxu0 0
    %447 = vmatpush1.bf16.msra.mxu0 0
    %448 = vmatprep.subr.bf16.mxu0 0
    %449 = vmatpush1.bf16.msra.mxu0 0
    %450 = vmatprep.subr.bf16.mxu0 0
    %451 = vmatpush1.bf16.msra.mxu0 0
    %452 = vmatprep.subr.bf16.mxu0 0
    %453 = vmatpush1.bf16.msra.mxu0 0
    %454 = vmatprep.subr.bf16.mxu0 0
    %455 = vmatpush1.bf16.msra.mxu0 0
    %456 = vmatprep.subr.bf16.mxu0 0
    %457 = vmatpush1.bf16.msra.mxu0 0
    %458 = vmatprep.subr.bf16.mxu0 0
    %459 = vmatpush1.bf16.msra.mxu0 0
    %460 = vmatprep.subr.bf16.mxu0 0
    %461 = vmatpush1.bf16.msra.mxu0 0
    %462 = vmatprep.subr.bf16.mxu0 0
    %463 = vmatpush1.bf16.msra.mxu0 0
    %464 = vmatprep.subr.bf16.mxu0 0
    %465 = vmatpush1.bf16.msra.mxu0 0
    %466 = vmatprep.subr.bf16.mxu0 0
    %467 = vmatpush1.bf16.msra.mxu0 0
    %468 = vmatprep.subr.bf16.mxu0 0
    %469 = vmatpush1.bf16.msra.mxu0 0
    %470 = vmatprep.mubr.bf16.mxu0 0
    %471 = vmatmul.mubr.bf16.gmra.mrb[0].mxu0 %v436
    %v472 = vpop.f32.mrb[0].mxu0
    %v473 = vadd.f32 0.0, %v472
    %v474 = vpop.f32.mrb[0].mxu0
    %v475 = vpop.f32.mrb[0].mxu0
    %v476 = vpop.f32.mrb[0].mxu0
    %477 = vdwg.mxu0
    %v478 = vadd.f32 %v365, %v473
    %s479 = scalar_lea.vmem [#allocation2], 6
    %v480 = vld [vmem:[%s479] sm:$0x3]
    %v481 = vpack.c.bf16 %v480, %v480
    %v483 = vsel %vm152, %v481, 0
    %485 = vmatprep.subr.bf16.mxu0 0
    %486 = vmatpush1.bf16.msra.mxu0 %v158
    %487 = vmatprep.subr.bf16.mxu0 0
    %488 = vmatpush1.bf16.msra.mxu0 0
    %489 = vmatprep.subr.bf16.mxu0 0
    %490 = vmatpush1.bf16.msra.mxu0 0
    %491 = vmatprep.subr.bf16.mxu0 0
    %492 = vmatpush1.bf16.msra.mxu0 0
    %493 = vmatprep.subr.bf16.mxu0 0
    %494 = vmatpush1.bf16.msra.mxu0 0
    %495 = vmatprep.subr.bf16.mxu0 0
    %496 = vmatpush1.bf16.msra.mxu0 0
    %497 = vmatprep.subr.bf16.mxu0 0
    %498 = vmatpush1.bf16.msra.mxu0 0
    %499 = vmatprep.subr.bf16.mxu0 0
    %500 = vmatpush1.bf16.msra.mxu0 0
    %501 = vmatprep.subr.bf16.mxu0 0
    %502 = vmatpush1.bf16.msra.mxu0 0
    %503 = vmatprep.subr.bf16.mxu0 0
    %504 = vmatpush1.bf16.msra.mxu0 0
    %505 = vmatprep.subr.bf16.mxu0 0
    %506 = vmatpush1.bf16.msra.mxu0 0
    %507 = vmatprep.subr.bf16.mxu0 0
    %508 = vmatpush1.bf16.msra.mxu0 0
    %509 = vmatprep.subr.bf16.mxu0 0
    %510 = vmatpush1.bf16.msra.mxu0 0
    %511 = vmatprep.subr.bf16.mxu0 0
    %512 = vmatpush1.bf16.msra.mxu0 0
    %513 = vmatprep.subr.bf16.mxu0 0
    %514 = vmatpush1.bf16.msra.mxu0 0
    %515 = vmatprep.subr.bf16.mxu0 0
    %516 = vmatpush1.bf16.msra.mxu0 0
    %517 = vmatprep.mubr.bf16.mxu0 0
    %518 = vmatmul.mubr.bf16.gmra.mrb[0].mxu0 %v483
    %v519 = vpop.f32.mrb[0].mxu0
    %v520 = vadd.f32 0.0, %v519
    %v521 = vpop.f32.mrb[0].mxu0
    %v522 = vpop.f32.mrb[0].mxu0
    %v523 = vpop.f32.mrb[0].mxu0
    %524 = vdwg.mxu0
    %v525 = vmax.f32 %v520, 0.0
    %v526 = vpack.c.bf16 %v525, %v525
    %s527 = scalar_lea.vmem [#allocation7], 48
    %v528 = vld [vmem:[%s527] sm:$0xf]
    %v529 = vld [vmem:[%s527 + $0x4] sm:$0xf]
    %v530 = vld [vmem:[%s527 + $0x8] sm:$0xf]
    %v531 = vld [vmem:[%s527 + $0xc] sm:$0xf]
    %v536 = vunpack.c.l.b16 %v528
    %v537 = vunpack.c.l.b16 %v529
    %v538 = vunpack.c.l.b16 %v530
    %v539 = vunpack.c.l.b16 %v531
    %v540 = vpack.c.b16 %v537, %v536
    %v541 = vpack.c.b16 %v539, %v538
    %v545 = vsel %vm271, %v526, 0
    %547 = vmatprep.subr.bf16.mxu0 0
    %548 = vmatpush1.bf16.msra.mxu0 %v540
    %549 = vmatprep.subr.bf16.mxu0 0
    %550 = vmatpush1.bf16.msra.mxu0 %v541
    %551 = vmatprep.subr.bf16.mxu0 0
    %552 = vmatpush1.bf16.msra.mxu0 0
    %553 = vmatprep.subr.bf16.mxu0 0
    %554 = vmatpush1.bf16.msra.mxu0 0
    %555 = vmatprep.subr.bf16.mxu0 0
    %556 = vmatpush1.bf16.msra.mxu0 0
    %557 = vmatprep.subr.bf16.mxu0 0
    %558 = vmatpush1.bf16.msra.mxu0 0
    %559 = vmatprep.subr.bf16.mxu0 0
    %560 = vmatpush1.bf16.msra.mxu0 0
    %561 = vmatprep.subr.bf16.mxu0 0
    %562 = vmatpush1.bf16.msra.mxu0 0
    %563 = vmatprep.subr.bf16.mxu0 0
    %564 = vmatpush1.bf16.msra.mxu0 0
    %565 = vmatprep.subr.bf16.mxu0 0
    %566 = vmatpush1.bf16.msra.mxu0 0
    %567 = vmatprep.subr.bf16.mxu0 0
    %568 = vmatpush1.bf16.msra.mxu0 0
    %569 = vmatprep.subr.bf16.mxu0 0
    %570 = vmatpush1.bf16.msra.mxu0 0
    %571 = vmatprep.subr.bf16.mxu0 0
    %572 = vmatpush1.bf16.msra.mxu0 0
    %573 = vmatprep.subr.bf16.mxu0 0
    %574 = vmatpush1.bf16.msra.mxu0 0
    %575 = vmatprep.subr.bf16.mxu0 0
    %576 = vmatpush1.bf16.msra.mxu0 0
    %577 = vmatprep.subr.bf16.mxu0 0
    %578 = vmatpush1.bf16.msra.mxu0 0
    %579 = vmatprep.mubr.bf16.mxu0 0
    %580 = vmatmul.mubr.bf16.gmra.mrb[0].mxu0 %v545
    %v581 = vpop.f32.mrb[0].mxu0
    %v582 = vadd.f32 0.0, %v581
    %v583 = vpop.f32.mrb[0].mxu0
    %v584 = vpop.f32.mrb[0].mxu0
    %v585 = vpop.f32.mrb[0].mxu0
    %586 = vdwg.mxu0
    %v587 = vadd.f32 %v478, %v582
    %s588 = scalar_lea.vmem [#allocation2], 8
    %v589 = vld [vmem:[%s588] sm:$0x3]
    %v590 = vpack.c.bf16 %v589, %v589
    %v592 = vsel %vm152, %v590, 0
    %594 = vmatprep.subr.bf16.mxu0 0
    %595 = vmatpush1.bf16.msra.mxu0 %v158
    %596 = vmatprep.subr.bf16.mxu0 0
    %597 = vmatpush1.bf16.msra.mxu0 0
    %598 = vmatprep.subr.bf16.mxu0 0
    %599 = vmatpush1.bf16.msra.mxu0 0
    %600 = vmatprep.subr.bf16.mxu0 0
    %601 = vmatpush1.bf16.msra.mxu0 0
    %602 = vmatprep.subr.bf16.mxu0 0
    %603 = vmatpush1.bf16.msra.mxu0 0
    %604 = vmatprep.subr.bf16.mxu0 0
    %605 = vmatpush1.bf16.msra.mxu0 0
    %606 = vmatprep.subr.bf16.mxu0 0
    %607 = vmatpush1.bf16.msra.mxu0 0
    %608 = vmatprep.subr.bf16.mxu0 0
    %609 = vmatpush1.bf16.msra.mxu0 0
    %610 = vmatprep.subr.bf16.mxu0 0
    %611 = vmatpush1.bf16.msra.mxu0 0
    %612 = vmatprep.subr.bf16.mxu0 0
    %613 = vmatpush1.bf16.msra.mxu0 0
    %614 = vmatprep.subr.bf16.mxu0 0
    %615 = vmatpush1.bf16.msra.mxu0 0
    %616 = vmatprep.subr.bf16.mxu0 0
    %617 = vmatpush1.bf16.msra.mxu0 0
    %618 = vmatprep.subr.bf16.mxu0 0
    %619 = vmatpush1.bf16.msra.mxu0 0
    %620 = vmatprep.subr.bf16.mxu0 0
    %621 = vmatpush1.bf16.msra.mxu0 0
    %622 = vmatprep.subr.bf16.mxu0 0
    %623 = vmatpush1.bf16.msra.mxu0 0
    %624 = vmatprep.subr.bf16.mxu0 0
    %625 = vmatpush1.bf16.msra.mxu0 0
    %626 = vmatprep.mubr.bf16.mxu0 0
    %627 = vmatmul.mubr.bf16.gmra.mrb[0].mxu0 %v592
    %v628 = vpop.f32.mrb[0].mxu0
    %v629 = vadd.f32 0.0, %v628
    %v630 = vpop.f32.mrb[0].mxu0
    %v631 = vpop.f32.mrb[0].mxu0
    %v632 = vpop.f32.mrb[0].mxu0
    %633 = vdwg.mxu0
    %v634 = vmax.f32 %v629, 0.0
    %v635 = vpack.c.bf16 %v634, %v634
    %s636 = scalar_lea.vmem [#allocation7], 64
    %v637 = vld [vmem:[%s636] sm:$0xf]
    %v638 = vld [vmem:[%s636 + $0x4] sm:$0xf]
    %v639 = vld [vmem:[%s636 + $0x8] sm:$0xf]
    %v640 = vld [vmem:[%s636 + $0xc] sm:$0xf]
    %v645 = vunpack.c.l.b16 %v637
    %v646 = vunpack.c.l.b16 %v638
    %v647 = vunpack.c.l.b16 %v639
    %v648 = vunpack.c.l.b16 %v640
    %v649 = vpack.c.b16 %v646, %v645
    %v650 = vpack.c.b16 %v648, %v647
    %v654 = vsel %vm271, %v635, 0
    %656 = vmatprep.subr.bf16.mxu0 0
    %657 = vmatpush1.bf16.msra.mxu0 %v649
    %658 = vmatprep.subr.bf16.mxu0 0
    %659 = vmatpush1.bf16.msra.mxu0 %v650
    %660 = vmatprep.subr.bf16.mxu0 0
    %661 = vmatpush1.bf16.msra.mxu0 0
    %662 = vmatprep.subr.bf16.mxu0 0
    %663 = vmatpush1.bf16.msra.mxu0 0
    %664 = vmatprep.subr.bf16.mxu0 0
    %665 = vmatpush1.bf16.msra.mxu0 0
    %666 = vmatprep.subr.bf16.mxu0 0
    %667 = vmatpush1.bf16.msra.mxu0 0
    %668 = vmatprep.subr.bf16.mxu0 0
    %669 = vmatpush1.bf16.msra.mxu0 0
    %670 = vmatprep.subr.bf16.mxu0 0
    %671 = vmatpush1.bf16.msra.mxu0 0
    %672 = vmatprep.subr.bf16.mxu0 0
    %673 = vmatpush1.bf16.msra.mxu0 0
    %674 = vmatprep.subr.bf16.mxu0 0
    %675 = vmatpush1.bf16.msra.mxu0 0
    %676 = vmatprep.subr.bf16.mxu0 0
    %677 = vmatpush1.bf16.msra.mxu0 0
    %678 = vmatprep.subr.bf16.mxu0 0
    %679 = vmatpush1.bf16.msra.mxu0 0
    %680 = vmatprep.subr.bf16.mxu0 0
    %681 = vmatpush1.bf16.msra.mxu0 0
    %682 = vmatprep.subr.bf16.mxu0 0
    %683 = vmatpush1.bf16.msra.mxu0 0
    %684 = vmatprep.subr.bf16.mxu0 0
    %685 = vmatpush1.bf16.msra.mxu0 0
    %686 = vmatprep.subr.bf16.mxu0 0
    %687 = vmatpush1.bf16.msra.mxu0 0
    %688 = vmatprep.mubr.bf16.mxu0 0
    %689 = vmatmul.mubr.bf16.gmra.mrb[0].mxu0 %v654
    %v690 = vpop.f32.mrb[0].mxu0
    %v691 = vadd.f32 0.0, %v690
    %v692 = vpop.f32.mrb[0].mxu0
    %v693 = vpop.f32.mrb[0].mxu0
    %v694 = vpop.f32.mrb[0].mxu0
    %695 = vdwg.mxu0
    %v696 = vadd.f32 %v587, %v691
    %s697 = scalar_lea.vmem [#allocation2], 10
    %v698 = vld [vmem:[%s697] sm:$0x3]
    %v699 = vpack.c.bf16 %v698, %v698
    %v701 = vsel %vm152, %v699, 0
    %703 = vmatprep.subr.bf16.mxu0 0
    %704 = vmatpush1.bf16.msra.mxu0 %v158
    %705 = vmatprep.subr.bf16.mxu0 0
    %706 = vmatpush1.bf16.msra.mxu0 0
    %707 = vmatprep.subr.bf16.mxu0 0
    %708 = vmatpush1.bf16.msra.mxu0 0
    %709 = vmatprep.subr.bf16.mxu0 0
    %710 = vmatpush1.bf16.msra.mxu0 0
    %711 = vmatprep.subr.bf16.mxu0 0
    %712 = vmatpush1.bf16.msra.mxu0 0
    %713 = vmatprep.subr.bf16.mxu0 0
    %714 = vmatpush1.bf16.msra.mxu0 0
    %715 = vmatprep.subr.bf16.mxu0 0
    %716 = vmatpush1.bf16.msra.mxu0 0
    %717 = vmatprep.subr.bf16.mxu0 0
    %718 = vmatpush1.bf16.msra.mxu0 0
    %719 = vmatprep.subr.bf16.mxu0 0
    %720 = vmatpush1.bf16.msra.mxu0 0
    %721 = vmatprep.subr.bf16.mxu0 0
    %722 = vmatpush1.bf16.msra.mxu0 0
    %723 = vmatprep.subr.bf16.mxu0 0
    %724 = vmatpush1.bf16.msra.mxu0 0
    %725 = vmatprep.subr.bf16.mxu0 0
    %726 = vmatpush1.bf16.msra.mxu0 0
    %727 = vmatprep.subr.bf16.mxu0 0
    %728 = vmatpush1.bf16.msra.mxu0 0
    %729 = vmatprep.subr.bf16.mxu0 0
    %730 = vmatpush1.bf16.msra.mxu0 0
    %731 = vmatprep.subr.bf16.mxu0 0
    %732 = vmatpush1.bf16.msra.mxu0 0
    %733 = vmatprep.subr.bf16.mxu0 0
    %734 = vmatpush1.bf16.msra.mxu0 0
    %735 = vmatprep.mubr.bf16.mxu0 0
    %736 = vmatmul.mubr.bf16.gmra.mrb[0].mxu0 %v701
    %v737 = vpop.f32.mrb[0].mxu0
    %v738 = vadd.f32 0.0, %v737
    %v739 = vpop.f32.mrb[0].mxu0
    %v740 = vpop.f32.mrb[0].mxu0
    %v741 = vpop.f32.mrb[0].mxu0
    %742 = vdwg.mxu0
    %v743 = vmax.f32 %v738, 0.0
    %v744 = vpack.c.bf16 %v743, %v743
    %s745 = scalar_lea.vmem [#allocation7], 80
    %v746 = vld [vmem:[%s745] sm:$0xf]
    %v747 = vld [vmem:[%s745 + $0x4] sm:$0xf]
    %v748 = vld [vmem:[%s745 + $0x8] sm:$0xf]
    %v749 = vld [vmem:[%s745 + $0xc] sm:$0xf]
    %v754 = vunpack.c.l.b16 %v746
    %v755 = vunpack.c.l.b16 %v747
    %v756 = vunpack.c.l.b16 %v748
    %v757 = vunpack.c.l.b16 %v749
    %v758 = vpack.c.b16 %v755, %v754
    %v759 = vpack.c.b16 %v757, %v756
    %v763 = vsel %vm271, %v744, 0
    %765 = vmatprep.subr.bf16.mxu0 0
    %766 = vmatpush1.bf16.msra.mxu0 %v758
    %767 = vmatprep.subr.bf16.mxu0 0
    %768 = vmatpush1.bf16.msra.mxu0 %v759
    %769 = vmatprep.subr.bf16.mxu0 0
    %770 = vmatpush1.bf16.msra.mxu0 0
    %771 = vmatprep.subr.bf16.mxu0 0
    %772 = vmatpush1.bf16.msra.mxu0 0
    %773 = vmatprep.subr.bf16.mxu0 0
    %774 = vmatpush1.bf16.msra.mxu0 0
    %775 = vmatprep.subr.bf16.mxu0 0
    %776 = vmatpush1.bf16.msra.mxu0 0
    %777 = vmatprep.subr.bf16.mxu0 0
    %778 = vmatpush1.bf16.msra.mxu0 0
    %779 = vmatprep.subr.bf16.mxu0 0
    %780 = vmatpush1.bf16.msra.mxu0 0
    %781 = vmatprep.subr.bf16.mxu0 0
    %782 = vmatpush1.bf16.msra.mxu0 0
    %783 = vmatprep.subr.bf16.mxu0 0
    %784 = vmatpush1.bf16.msra.mxu0 0
    %785 = vmatprep.subr.bf16.mxu0 0
    %786 = vmatpush1.bf16.msra.mxu0 0
    %787 = vmatprep.subr.bf16.mxu0 0
    %788 = vmatpush1.bf16.msra.mxu0 0
    %789 = vmatprep.subr.bf16.mxu0 0
    %790 = vmatpush1.bf16.msra.mxu0 0
    %791 = vmatprep.subr.bf16.mxu0 0
    %792 = vmatpush1.bf16.msra.mxu0 0
    %793 = vmatprep.subr.bf16.mxu0 0
    %794 = vmatpush1.bf16.msra.mxu0 0
    %795 = vmatprep.subr.bf16.mxu0 0
    %796 = vmatpush1.bf16.msra.mxu0 0
    %797 = vmatprep.mubr.bf16.mxu0 0
    %798 = vmatmul.mubr.bf16.gmra.mrb[0].mxu0 %v763
    %v799 = vpop.f32.mrb[0].mxu0
    %v800 = vadd.f32 0.0, %v799
    %v801 = vpop.f32.mrb[0].mxu0
    %v802 = vpop.f32.mrb[0].mxu0
    %v803 = vpop.f32.mrb[0].mxu0
    %804 = vdwg.mxu0
    %v805 = vadd.f32 %v696, %v800
    %s806 = scalar_lea.vmem [#allocation2], 12
    %v807 = vld [vmem:[%s806] sm:$0x3]
    %v808 = vpack.c.bf16 %v807, %v807
    %v810 = vsel %vm152, %v808, 0
    %812 = vmatprep.subr.bf16.mxu0 0
    %813 = vmatpush1.bf16.msra.mxu0 %v158
    %814 = vmatprep.subr.bf16.mxu0 0
    %815 = vmatpush1.bf16.msra.mxu0 0
    %816 = vmatprep.subr.bf16.mxu0 0
    %817 = vmatpush1.bf16.msra.mxu0 0
    %818 = vmatprep.subr.bf16.mxu0 0
    %819 = vmatpush1.bf16.msra.mxu0 0
    %820 = vmatprep.subr.bf16.mxu0 0
    %821 = vmatpush1.bf16.msra.mxu0 0
    %822 = vmatprep.subr.bf16.mxu0 0
    %823 = vmatpush1.bf16.msra.mxu0 0
    %824 = vmatprep.subr.bf16.mxu0 0
    %825 = vmatpush1.bf16.msra.mxu0 0
    %826 = vmatprep.subr.bf16.mxu0 0
    %827 = vmatpush1.bf16.msra.mxu0 0
    %828 = vmatprep.subr.bf16.mxu0 0
    %829 = vmatpush1.bf16.msra.mxu0 0
    %830 = vmatprep.subr.bf16.mxu0 0
    %831 = vmatpush1.bf16.msra.mxu0 0
    %832 = vmatprep.subr.bf16.mxu0 0
    %833 = vmatpush1.bf16.msra.mxu0 0
    %834 = vmatprep.subr.bf16.mxu0 0
    %835 = vmatpush1.bf16.msra.mxu0 0
    %836 = vmatprep.subr.bf16.mxu0 0
    %837 = vmatpush1.bf16.msra.mxu0 0
    %838 = vmatprep.subr.bf16.mxu0 0
    %839 = vmatpush1.bf16.msra.mxu0 0
    %840 = vmatprep.subr.bf16.mxu0 0
    %841 = vmatpush1.bf16.msra.mxu0 0
    %842 = vmatprep.subr.bf16.mxu0 0
    %843 = vmatpush1.bf16.msra.mxu0 0
    %844 = vmatprep.mubr.bf16.mxu0 0
    %845 = vmatmul.mubr.bf16.gmra.mrb[0].mxu0 %v810
    %v846 = vpop.f32.mrb[0].mxu0
    %v847 = vadd.f32 0.0, %v846
    %v848 = vpop.f32.mrb[0].mxu0
    %v849 = vpop.f32.mrb[0].mxu0
    %v850 = vpop.f32.mrb[0].mxu0
    %851 = vdwg.mxu0
    %v852 = vmax.f32 %v847, 0.0
    %v853 = vpack.c.bf16 %v852, %v852
    %s854 = scalar_lea.vmem [#allocation7], 96
    %v855 = vld [vmem:[%s854] sm:$0xf]
    %v856 = vld [vmem:[%s854 + $0x4] sm:$0xf]
    %v857 = vld [vmem:[%s854 + $0x8] sm:$0xf]
    %v858 = vld [vmem:[%s854 + $0xc] sm:$0xf]
    %v863 = vunpack.c.l.b16 %v855
    %v864 = vunpack.c.l.b16 %v856
    %v865 = vunpack.c.l.b16 %v857
    %v866 = vunpack.c.l.b16 %v858
    %v867 = vpack.c.b16 %v864, %v863
    %v868 = vpack.c.b16 %v866, %v865
    %v872 = vsel %vm271, %v853, 0
    %874 = vmatprep.subr.bf16.mxu0 0
    %875 = vmatpush1.bf16.msra.mxu0 %v867
    %876 = vmatprep.subr.bf16.mxu0 0
    %877 = vmatpush1.bf16.msra.mxu0 %v868
    %878 = vmatprep.subr.bf16.mxu0 0
    %879 = vmatpush1.bf16.msra.mxu0 0
    %880 = vmatprep.subr.bf16.mxu0 0
    %881 = vmatpush1.bf16.msra.mxu0 0
    %882 = vmatprep.subr.bf16.mxu0 0
    %883 = vmatpush1.bf16.msra.mxu0 0
    %884 = vmatprep.subr.bf16.mxu0 0
    %885 = vmatpush1.bf16.msra.mxu0 0
    %886 = vmatprep.subr.bf16.mxu0 0
    %887 = vmatpush1.bf16.msra.mxu0 0
    %888 = vmatprep.subr.bf16.mxu0 0
    %889 = vmatpush1.bf16.msra.mxu0 0
    %890 = vmatprep.subr.bf16.mxu0 0
    %891 = vmatpush1.bf16.msra.mxu0 0
    %892 = vmatprep.subr.bf16.mxu0 0
    %893 = vmatpush1.bf16.msra.mxu0 0
    %894 = vmatprep.subr.bf16.mxu0 0
    %895 = vmatpush1.bf16.msra.mxu0 0
    %896 = vmatprep.subr.bf16.mxu0 0
    %897 = vmatpush1.bf16.msra.mxu0 0
    %898 = vmatprep.subr.bf16.mxu0 0
    %899 = vmatpush1.bf16.msra.mxu0 0
    %900 = vmatprep.subr.bf16.mxu0 0
    %901 = vmatpush1.bf16.msra.mxu0 0
    %902 = vmatprep.subr.bf16.mxu0 0
    %903 = vmatpush1.bf16.msra.mxu0 0
    %904 = vmatprep.subr.bf16.mxu0 0
    %905 = vmatpush1.bf16.msra.mxu0 0
    %906 = vmatprep.mubr.bf16.mxu0 0
    %907 = vmatmul.mubr.bf16.gmra.mrb[0].mxu0 %v872
    %v908 = vpop.f32.mrb[0].mxu0
    %v909 = vadd.f32 0.0, %v908
    %v910 = vpop.f32.mrb[0].mxu0
    %v911 = vpop.f32.mrb[0].mxu0
    %v912 = vpop.f32.mrb[0].mxu0
    %913 = vdwg.mxu0
    %v914 = vadd.f32 %v805, %v909
    %s915 = scalar_lea.vmem [#allocation2], 14
    %v916 = vld [vmem:[%s915] sm:$0x3]
    %v917 = vpack.c.bf16 %v916, %v916
    %v919 = vsel %vm152, %v917, 0
    %921 = vmatprep.subr.bf16.mxu0 0
    %922 = vmatpush1.bf16.msra.mxu0 %v158
    %923 = vmatprep.subr.bf16.mxu0 0
    %924 = vmatpush1.bf16.msra.mxu0 0
    %925 = vmatprep.subr.bf16.mxu0 0
    %926 = vmatpush1.bf16.msra.mxu0 0
    %927 = vmatprep.subr.bf16.mxu0 0
    %928 = vmatpush1.bf16.msra.mxu0 0
    %929 = vmatprep.subr.bf16.mxu0 0
    %930 = vmatpush1.bf16.msra.mxu0 0
    %931 = vmatprep.subr.bf16.mxu0 0
    %932 = vmatpush1.bf16.msra.mxu0 0
    %933 = vmatprep.subr.bf16.mxu0 0
    %934 = vmatpush1.bf16.msra.mxu0 0
    %935 = vmatprep.subr.bf16.mxu0 0
    %936 = vmatpush1.bf16.msra.mxu0 0
    %937 = vmatprep.subr.bf16.mxu0 0
    %938 = vmatpush1.bf16.msra.mxu0 0
    %939 = vmatprep.subr.bf16.mxu0 0
    %940 = vmatpush1.bf16.msra.mxu0 0
    %941 = vmatprep.subr.bf16.mxu0 0
    %942 = vmatpush1.bf16.msra.mxu0 0
    %943 = vmatprep.subr.bf16.mxu0 0
    %944 = vmatpush1.bf16.msra.mxu0 0
    %945 = vmatprep.subr.bf16.mxu0 0
    %946 = vmatpush1.bf16.msra.mxu0 0
    %947 = vmatprep.subr.bf16.mxu0 0
    %948 = vmatpush1.bf16.msra.mxu0 0
    %949 = vmatprep.subr.bf16.mxu0 0
    %950 = vmatpush1.bf16.msra.mxu0 0
    %951 = vmatprep.subr.bf16.mxu0 0
    %952 = vmatpush1.bf16.msra.mxu0 0
    %953 = vmatprep.mubr.bf16.mxu0 0
    %954 = vmatmul.mubr.bf16.gmra.mrb[0].mxu0 %v919
    %v955 = vpop.f32.mrb[0].mxu0
    %v956 = vadd.f32 0.0, %v955
    %v957 = vpop.f32.mrb[0].mxu0
    %v958 = vpop.f32.mrb[0].mxu0
    %v959 = vpop.f32.mrb[0].mxu0
    %960 = vdwg.mxu0
    %v961 = vmax.f32 %v956, 0.0
    %v962 = vpack.c.bf16 %v961, %v961
    %s963 = scalar_lea.vmem [#allocation7], 112
    %v964 = vld [vmem:[%s963] sm:$0xf]
    %v965 = vld [vmem:[%s963 + $0x4] sm:$0xf]
    %v966 = vld [vmem:[%s963 + $0x8] sm:$0xf]
    %v967 = vld [vmem:[%s963 + $0xc] sm:$0xf]
    %v972 = vunpack.c.l.b16 %v964
    %v973 = vunpack.c.l.b16 %v965
    %v974 = vunpack.c.l.b16 %v966
    %v975 = vunpack.c.l.b16 %v967
    %v976 = vpack.c.b16 %v973, %v972
    %v977 = vpack.c.b16 %v975, %v974
    %v981 = vsel %vm271, %v962, 0
    %983 = vmatprep.subr.bf16.mxu0 0
    %984 = vmatpush1.bf16.msra.mxu0 %v976
    %985 = vmatprep.subr.bf16.mxu0 0
    %986 = vmatpush1.bf16.msra.mxu0 %v977
    %987 = vmatprep.subr.bf16.mxu0 0
    %988 = vmatpush1.bf16.msra.mxu0 0
    %989 = vmatprep.subr.bf16.mxu0 0
    %990 = vmatpush1.bf16.msra.mxu0 0
    %991 = vmatprep.subr.bf16.mxu0 0
    %992 = vmatpush1.bf16.msra.mxu0 0
    %993 = vmatprep.subr.bf16.mxu0 0
    %994 = vmatpush1.bf16.msra.mxu0 0
    %995 = vmatprep.subr.bf16.mxu0 0
    %996 = vmatpush1.bf16.msra.mxu0 0
    %997 = vmatprep.subr.bf16.mxu0 0
    %998 = vmatpush1.bf16.msra.mxu0 0
    %999 = vmatprep.subr.bf16.mxu0 0
    %1000 = vmatpush1.bf16.msra.mxu0 0
    %1001 = vmatprep.subr.bf16.mxu0 0
    %1002 = vmatpush1.bf16.msra.mxu0 0
    %1003 = vmatprep.subr.bf16.mxu0 0
    %1004 = vmatpush1.bf16.msra.mxu0 0
    %1005 = vmatprep.subr.bf16.mxu0 0
    %1006 = vmatpush1.bf16.msra.mxu0 0
    %1007 = vmatprep.subr.bf16.mxu0 0
    %1008 = vmatpush1.bf16.msra.mxu0 0
    %1009 = vmatprep.subr.bf16.mxu0 0
    %1010 = vmatpush1.bf16.msra.mxu0 0
    %1011 = vmatprep.subr.bf16.mxu0 0
    %1012 = vmatpush1.bf16.msra.mxu0 0
    %1013 = vmatprep.subr.bf16.mxu0 0
    %1014 = vmatpush1.bf16.msra.mxu0 0
    %1015 = vmatprep.mubr.bf16.mxu0 0
    %1016 = vmatmul.mubr.bf16.gmra.mrb[0].mxu0 %v981
    %v1017 = vpop.f32.mrb[0].mxu0
    %v1018 = vadd.f32 0.0, %v1017
    %v1019 = vpop.f32.mrb[0].mxu0
    %v1020 = vpop.f32.mrb[0].mxu0
    %v1021 = vpop.f32.mrb[0].mxu0
    %1022 = vdwg.mxu0
    %v1023 = vadd.f32 %v914, %v1018
    %s1024 = scalar_lea.vmem [#allocation2], 16
    %v1025 = vld [vmem:[%s1024] sm:$0x3]
    %v1026 = vpack.c.bf16 %v1025, %v1025
    %v1028 = vsel %vm152, %v1026, 0
    %1030 = vmatprep.subr.bf16.mxu0 0
    %1031 = vmatpush1.bf16.msra.mxu0 %v158
    %1032 = vmatprep.subr.bf16.mxu0 0
    %1033 = vmatpush1.bf16.msra.mxu0 0
    %1034 = vmatprep.subr.bf16.mxu0 0
    %1035 = vmatpush1.bf16.msra.mxu0 0
    %1036 = vmatprep.subr.bf16.mxu0 0
    %1037 = vmatpush1.bf16.msra.mxu0 0
    %1038 = vmatprep.subr.bf16.mxu0 0
    %1039 = vmatpush1.bf16.msra.mxu0 0
    %1040 = vmatprep.subr.bf16.mxu0 0
    %1041 = vmatpush1.bf16.msra.mxu0 0
    %1042 = vmatprep.subr.bf16.mxu0 0
    %1043 = vmatpush1.bf16.msra.mxu0 0
    %1044 = vmatprep.subr.bf16.mxu0 0
    %1045 = vmatpush1.bf16.msra.mxu0 0
    %1046 = vmatprep.subr.bf16.mxu0 0
    %1047 = vmatpush1.bf16.msra.mxu0 0
    %1048 = vmatprep.subr.bf16.mxu0 0
    %1049 = vmatpush1.bf16.msra.mxu0 0
    %1050 = vmatprep.subr.bf16.mxu0 0
    %1051 = vmatpush1.bf16.msra.mxu0 0
    %1052 = vmatprep.subr.bf16.mxu0 0
    %1053 = vmatpush1.bf16.msra.mxu0 0
    %1054 = vmatprep.subr.bf16.mxu0 0
    %1055 = vmatpush1.bf16.msra.mxu0 0
    %1056 = vmatprep.subr.bf16.mxu0 0
    %1057 = vmatpush1.bf16.msra.mxu0 0
    %1058 = vmatprep.subr.bf16.mxu0 0
    %1059 = vmatpush1.bf16.msra.mxu0 0
    %1060 = vmatprep.subr.bf16.mxu0 0
    %1061 = vmatpush1.bf16.msra.mxu0 0
    %1062 = vmatprep.mubr.bf16.mxu0 0
    %1063 = vmatmul.mubr.bf16.gmra.mrb[0].mxu0 %v1028
    %v1064 = vpop.f32.mrb[0].mxu0
    %v1065 = vadd.f32 0.0, %v1064
    %v1066 = vpop.f32.mrb[0].mxu0
    %v1067 = vpop.f32.mrb[0].mxu0
    %v1068 = vpop.f32.mrb[0].mxu0
    %1069 = vdwg.mxu0
    %v1070 = vmax.f32 %v1065, 0.0
    %v1071 = vpack.c.bf16 %v1070, %v1070
    %s1072 = scalar_lea.vmem [#allocation7], 128
    %v1073 = vld [vmem:[%s1072] sm:$0xf]
    %v1074 = vld [vmem:[%s1072 + $0x4] sm:$0xf]
    %v1075 = vld [vmem:[%s1072 + $0x8] sm:$0xf]
    %v1076 = vld [vmem:[%s1072 + $0xc] sm:$0xf]
    %v1081 = vunpack.c.l.b16 %v1073
    %v1082 = vunpack.c.l.b16 %v1074
    %v1083 = vunpack.c.l.b16 %v1075
    %v1084 = vunpack.c.l.b16 %v1076
    %v1085 = vpack.c.b16 %v1082, %v1081
    %v1086 = vpack.c.b16 %v1084, %v1083
    %v1090 = vsel %vm271, %v1071, 0
    %1092 = vmatprep.subr.bf16.mxu0 0
    %1093 = vmatpush1.bf16.msra.mxu0 %v1085
    %1094 = vmatprep.subr.bf16.mxu0 0
    %1095 = vmatpush1.bf16.msra.mxu0 %v1086
    %1096 = vmatprep.subr.bf16.mxu0 0
    %1097 = vmatpush1.bf16.msra.mxu0 0
    %1098 = vmatprep.subr.bf16.mxu0 0
    %1099 = vmatpush1.bf16.msra.mxu0 0
    %1100 = vmatprep.subr.bf16.mxu0 0
    %1101 = vmatpush1.bf16.msra.mxu0 0
    %1102 = vmatprep.subr.bf16.mxu0 0
    %1103 = vmatpush1.bf16.msra.mxu0 0
    %1104 = vmatprep.subr.bf16.mxu0 0
    %1105 = vmatpush1.bf16.msra.mxu0 0
    %1106 = vmatprep.subr.bf16.mxu0 0
    %1107 = vmatpush1.bf16.msra.mxu0 0
    %1108 = vmatprep.subr.bf16.mxu0 0
    %1109 = vmatpush1.bf16.msra.mxu0 0
    %1110 = vmatprep.subr.bf16.mxu0 0
    %1111 = vmatpush1.bf16.msra.mxu0 0
    %1112 = vmatprep.subr.bf16.mxu0 0
    %1113 = vmatpush1.bf16.msra.mxu0 0
    %1114 = vmatprep.subr.bf16.mxu0 0
    %1115 = vmatpush1.bf16.msra.mxu0 0
    %1116 = vmatprep.subr.bf16.mxu0 0
    %1117 = vmatpush1.bf16.msra.mxu0 0
    %1118 = vmatprep.subr.bf16.mxu0 0
    %1119 = vmatpush1.bf16.msra.mxu0 0
    %1120 = vmatprep.subr.bf16.mxu0 0
    %1121 = vmatpush1.bf16.msra.mxu0 0
    %1122 = vmatprep.subr.bf16.mxu0 0
    %1123 = vmatpush1.bf16.msra.mxu0 0
    %1124 = vmatprep.mubr.bf16.mxu0 0
    %1125 = vmatmul.mubr.bf16.gmra.mrb[0].mxu0 %v1090
    %v1126 = vpop.f32.mrb[0].mxu0
    %v1127 = vadd.f32 0.0, %v1126
    %v1128 = vpop.f32.mrb[0].mxu0
    %v1129 = vpop.f32.mrb[0].mxu0
    %v1130 = vpop.f32.mrb[0].mxu0
    %1131 = vdwg.mxu0
    %v1132 = vadd.f32 %v1023, %v1127
    %s1133 = scalar_lea.vmem [#allocation2], 18
    %v1134 = vld [vmem:[%s1133] sm:$0x3]
    %v1135 = vpack.c.bf16 %v1134, %v1134
    %v1137 = vsel %vm152, %v1135, 0
    %1139 = vmatprep.subr.bf16.mxu0 0
    %1140 = vmatpush1.bf16.msra.mxu0 %v158
    %1141 = vmatprep.subr.bf16.mxu0 0
    %1142 = vmatpush1.bf16.msra.mxu0 0
    %1143 = vmatprep.subr.bf16.mxu0 0
    %1144 = vmatpush1.bf16.msra.mxu0 0
    %1145 = vmatprep.subr.bf16.mxu0 0
    %1146 = vmatpush1.bf16.msra.mxu0 0
    %1147 = vmatprep.subr.bf16.mxu0 0
    %1148 = vmatpush1.bf16.msra.mxu0 0
    %1149 = vmatprep.subr.bf16.mxu0 0
    %1150 = vmatpush1.bf16.msra.mxu0 0
    %1151 = vmatprep.subr.bf16.mxu0 0
    %1152 = vmatpush1.bf16.msra.mxu0 0
    %1153 = vmatprep.subr.bf16.mxu0 0
    %1154 = vmatpush1.bf16.msra.mxu0 0
    %1155 = vmatprep.subr.bf16.mxu0 0
    %1156 = vmatpush1.bf16.msra.mxu0 0
    %1157 = vmatprep.subr.bf16.mxu0 0
    %1158 = vmatpush1.bf16.msra.mxu0 0
    %1159 = vmatprep.subr.bf16.mxu0 0
    %1160 = vmatpush1.bf16.msra.mxu0 0
    %1161 = vmatprep.subr.bf16.mxu0 0
    %1162 = vmatpush1.bf16.msra.mxu0 0
    %1163 = vmatprep.subr.bf16.mxu0 0
    %1164 = vmatpush1.bf16.msra.mxu0 0
    %1165 = vmatprep.subr.bf16.mxu0 0
    %1166 = vmatpush1.bf16.msra.mxu0 0
    %1167 = vmatprep.subr.bf16.mxu0 0
    %1168 = vmatpush1.bf16.msra.mxu0 0
    %1169 = vmatprep.subr.bf16.mxu0 0
    %1170 = vmatpush1.bf16.msra.mxu0 0
    %1171 = vmatprep.mubr.bf16.mxu0 0
    %1172 = vmatmul.mubr.bf16.gmra.mrb[0].mxu0 %v1137
    %v1173 = vpop.f32.mrb[0].mxu0
    %v1174 = vadd.f32 0.0, %v1173
    %v1175 = vpop.f32.mrb[0].mxu0
    %v1176 = vpop.f32.mrb[0].mxu0
    %v1177 = vpop.f32.mrb[0].mxu0
    %1178 = vdwg.mxu0
    %v1179 = vmax.f32 %v1174, 0.0
    %v1180 = vpack.c.bf16 %v1179, %v1179
    %s1181 = scalar_lea.vmem [#allocation7], 144
    %v1182 = vld [vmem:[%s1181] sm:$0xf]
    %v1183 = vld [vmem:[%s1181 + $0x4] sm:$0xf]
    %v1184 = vld [vmem:[%s1181 + $0x8] sm:$0xf]
    %v1185 = vld [vmem:[%s1181 + $0xc] sm:$0xf]
    %v1190 = vunpack.c.l.b16 %v1182
    %v1191 = vunpack.c.l.b16 %v1183
    %v1192 = vunpack.c.l.b16 %v1184
    %v1193 = vunpack.c.l.b16 %v1185
    %v1194 = vpack.c.b16 %v1191, %v1190
    %v1195 = vpack.c.b16 %v1193, %v1192
    %v1199 = vsel %vm271, %v1180, 0
    %1201 = vmatprep.subr.bf16.mxu0 0
    %1202 = vmatpush1.bf16.msra.mxu0 %v1194
    %1203 = vmatprep.subr.bf16.mxu0 0
    %1204 = vmatpush1.bf16.msra.mxu0 %v1195
    %1205 = vmatprep.subr.bf16.mxu0 0
    %1206 = vmatpush1.bf16.msra.mxu0 0
    %1207 = vmatprep.subr.bf16.mxu0 0
    %1208 = vmatpush1.bf16.msra.mxu0 0
    %1209 = vmatprep.subr.bf16.mxu0 0
    %1210 = vmatpush1.bf16.msra.mxu0 0
    %1211 = vmatprep.subr.bf16.mxu0 0
    %1212 = vmatpush1.bf16.msra.mxu0 0
    %1213 = vmatprep.subr.bf16.mxu0 0
    %1214 = vmatpush1.bf16.msra.mxu0 0
    %1215 = vmatprep.subr.bf16.mxu0 0
    %1216 = vmatpush1.bf16.msra.mxu0 0
    %1217 = vmatprep.subr.bf16.mxu0 0
    %1218 = vmatpush1.bf16.msra.mxu0 0
    %1219 = vmatprep.subr.bf16.mxu0 0
    %1220 = vmatpush1.bf16.msra.mxu0 0
    %1221 = vmatprep.subr.bf16.mxu0 0
    %1222 = vmatpush1.bf16.msra.mxu0 0
    %1223 = vmatprep.subr.bf16.mxu0 0
    %1224 = vmatpush1.bf16.msra.mxu0 0
    %1225 = vmatprep.subr.bf16.mxu0 0
    %1226 = vmatpush1.bf16.msra.mxu0 0
    %1227 = vmatprep.subr.bf16.mxu0 0
    %1228 = vmatpush1.bf16.msra.mxu0 0
    %1229 = vmatprep.subr.bf16.mxu0 0
    %1230 = vmatpush1.bf16.msra.mxu0 0
    %1231 = vmatprep.subr.bf16.mxu0 0
    %1232 = vmatpush1.bf16.msra.mxu0 0
    %1233 = vmatprep.mubr.bf16.mxu0 0
    %1234 = vmatmul.mubr.bf16.gmra.mrb[0].mxu0 %v1199
    %v1235 = vpop.f32.mrb[0].mxu0
    %v1236 = vadd.f32 0.0, %v1235
    %v1237 = vpop.f32.mrb[0].mxu0
    %v1238 = vpop.f32.mrb[0].mxu0
    %v1239 = vpop.f32.mrb[0].mxu0
    %1240 = vdwg.mxu0
    %v1241 = vadd.f32 %v1132, %v1236
    %s1242 = scalar_lea.vmem [#allocation2], 20
    %v1243 = vld [vmem:[%s1242] sm:$0x3]
    %v1244 = vpack.c.bf16 %v1243, %v1243
    %v1246 = vsel %vm152, %v1244, 0
    %1248 = vmatprep.subr.bf16.mxu0 0
    %1249 = vmatpush1.bf16.msra.mxu0 %v158
    %1250 = vmatprep.subr.bf16.mxu0 0
    %1251 = vmatpush1.bf16.msra.mxu0 0
    %1252 = vmatprep.subr.bf16.mxu0 0
    %1253 = vmatpush1.bf16.msra.mxu0 0
    %1254 = vmatprep.subr.bf16.mxu0 0
    %1255 = vmatpush1.bf16.msra.mxu0 0
    %1256 = vmatprep.subr.bf16.mxu0 0
    %1257 = vmatpush1.bf16.msra.mxu0 0
    %1258 = vmatprep.subr.bf16.mxu0 0
    %1259 = vmatpush1.bf16.msra.mxu0 0
    %1260 = vmatprep.subr.bf16.mxu0 0
    %1261 = vmatpush1.bf16.msra.mxu0 0
    %1262 = vmatprep.subr.bf16.mxu0 0
    %1263 = vmatpush1.bf16.msra.mxu0 0
    %1264 = vmatprep.subr.bf16.mxu0 0
    %1265 = vmatpush1.bf16.msra.mxu0 0
    %1266 = vmatprep.subr.bf16.mxu0 0
    %1267 = vmatpush1.bf16.msra.mxu0 0
    %1268 = vmatprep.subr.bf16.mxu0 0
    %1269 = vmatpush1.bf16.msra.mxu0 0
    %1270 = vmatprep.subr.bf16.mxu0 0
    %1271 = vmatpush1.bf16.msra.mxu0 0
    %1272 = vmatprep.subr.bf16.mxu0 0
    %1273 = vmatpush1.bf16.msra.mxu0 0
    %1274 = vmatprep.subr.bf16.mxu0 0
    %1275 = vmatpush1.bf16.msra.mxu0 0
    %1276 = vmatprep.subr.bf16.mxu0 0
    %1277 = vmatpush1.bf16.msra.mxu0 0
    %1278 = vmatprep.subr.bf16.mxu0 0
    %1279 = vmatpush1.bf16.msra.mxu0 0
    %1280 = vmatprep.mubr.bf16.mxu0 0
    %1281 = vmatmul.mubr.bf16.gmra.mrb[0].mxu0 %v1246
    %v1282 = vpop.f32.mrb[0].mxu0
    %v1283 = vadd.f32 0.0, %v1282
    %v1284 = vpop.f32.mrb[0].mxu0
    %v1285 = vpop.f32.mrb[0].mxu0
    %v1286 = vpop.f32.mrb[0].mxu0
    %1287 = vdwg.mxu0
    %v1288 = vmax.f32 %v1283, 0.0
    %v1289 = vpack.c.bf16 %v1288, %v1288
    %s1290 = scalar_lea.vmem [#allocation7], 160
    %v1291 = vld [vmem:[%s1290] sm:$0xf]
    %v1292 = vld [vmem:[%s1290 + $0x4] sm:$0xf]
    %v1293 = vld [vmem:[%s1290 + $0x8] sm:$0xf]
    %v1294 = vld [vmem:[%s1290 + $0xc] sm:$0xf]
    %v1299 = vunpack.c.l.b16 %v1291
    %v1300 = vunpack.c.l.b16 %v1292
    %v1301 = vunpack.c.l.b16 %v1293
    %v1302 = vunpack.c.l.b16 %v1294
    %v1303 = vpack.c.b16 %v1300, %v1299
    %v1304 = vpack.c.b16 %v1302, %v1301
    %v1308 = vsel %vm271, %v1289, 0
    %1310 = vmatprep.subr.bf16.mxu0 0
    %1311 = vmatpush1.bf16.msra.mxu0 %v1303
    %1312 = vmatprep.subr.bf16.mxu0 0
    %1313 = vmatpush1.bf16.msra.mxu0 %v1304
    %1314 = vmatprep.subr.bf16.mxu0 0
    %1315 = vmatpush1.bf16.msra.mxu0 0
    %1316 = vmatprep.subr.bf16.mxu0 0
    %1317 = vmatpush1.bf16.msra.mxu0 0
    %1318 = vmatprep.subr.bf16.mxu0 0
    %1319 = vmatpush1.bf16.msra.mxu0 0
    %1320 = vmatprep.subr.bf16.mxu0 0
    %1321 = vmatpush1.bf16.msra.mxu0 0
    %1322 = vmatprep.subr.bf16.mxu0 0
    %1323 = vmatpush1.bf16.msra.mxu0 0
    %1324 = vmatprep.subr.bf16.mxu0 0
    %1325 = vmatpush1.bf16.msra.mxu0 0
    %1326 = vmatprep.subr.bf16.mxu0 0
    %1327 = vmatpush1.bf16.msra.mxu0 0
    %1328 = vmatprep.subr.bf16.mxu0 0
    %1329 = vmatpush1.bf16.msra.mxu0 0
    %1330 = vmatprep.subr.bf16.mxu0 0
    %1331 = vmatpush1.bf16.msra.mxu0 0
    %1332 = vmatprep.subr.bf16.mxu0 0
    %1333 = vmatpush1.bf16.msra.mxu0 0
    %1334 = vmatprep.subr.bf16.mxu0 0
    %1335 = vmatpush1.bf16.msra.mxu0 0
    %1336 = vmatprep.subr.bf16.mxu0 0
    %1337 = vmatpush1.bf16.msra.mxu0 0
    %1338 = vmatprep.subr.bf16.mxu0 0
    %1339 = vmatpush1.bf16.msra.mxu0 0
    %1340 = vmatprep.subr.bf16.mxu0 0
    %1341 = vmatpush1.bf16.msra.mxu0 0
    %1342 = vmatprep.mubr.bf16.mxu0 0
    %1343 = vmatmul.mubr.bf16.gmra.mrb[0].mxu0 %v1308
    %v1344 = vpop.f32.mrb[0].mxu0
    %v1345 = vadd.f32 0.0, %v1344
    %v1346 = vpop.f32.mrb[0].mxu0
    %v1347 = vpop.f32.mrb[0].mxu0
    %v1348 = vpop.f32.mrb[0].mxu0
    %1349 = vdwg.mxu0
    %v1350 = vadd.f32 %v1241, %v1345
    %s1351 = scalar_lea.vmem [#allocation2], 22
    %v1352 = vld [vmem:[%s1351] sm:$0x3]
    %v1353 = vpack.c.bf16 %v1352, %v1352
    %v1355 = vsel %vm152, %v1353, 0
    %1357 = vmatprep.subr.bf16.mxu0 0
    %1358 = vmatpush1.bf16.msra.mxu0 %v158
    %1359 = vmatprep.subr.bf16.mxu0 0
    %1360 = vmatpush1.bf16.msra.mxu0 0
    %1361 = vmatprep.subr.bf16.mxu0 0
    %1362 = vmatpush1.bf16.msra.mxu0 0
    %1363 = vmatprep.subr.bf16.mxu0 0
    %1364 = vmatpush1.bf16.msra.mxu0 0
    %1365 = vmatprep.subr.bf16.mxu0 0
    %1366 = vmatpush1.bf16.msra.mxu0 0
    %1367 = vmatprep.subr.bf16.mxu0 0
    %1368 = vmatpush1.bf16.msra.mxu0 0
    %1369 = vmatprep.subr.bf16.mxu0 0
    %1370 = vmatpush1.bf16.msra.mxu0 0
    %1371 = vmatprep.subr.bf16.mxu0 0
    %1372 = vmatpush1.bf16.msra.mxu0 0
    %1373 = vmatprep.subr.bf16.mxu0 0
    %1374 = vmatpush1.bf16.msra.mxu0 0
    %1375 = vmatprep.subr.bf16.mxu0 0
    %1376 = vmatpush1.bf16.msra.mxu0 0
    %1377 = vmatprep.subr.bf16.mxu0 0
    %1378 = vmatpush1.bf16.msra.mxu0 0
    %1379 = vmatprep.subr.bf16.mxu0 0
    %1380 = vmatpush1.bf16.msra.mxu0 0
    %1381 = vmatprep.subr.bf16.mxu0 0
    %1382 = vmatpush1.bf16.msra.mxu0 0
    %1383 = vmatprep.subr.bf16.mxu0 0
    %1384 = vmatpush1.bf16.msra.mxu0 0
    %1385 = vmatprep.subr.bf16.mxu0 0
    %1386 = vmatpush1.bf16.msra.mxu0 0
    %1387 = vmatprep.subr.bf16.mxu0 0
    %1388 = vmatpush1.bf16.msra.mxu0 0
    %1389 = vmatprep.mubr.bf16.mxu0 0
    %1390 = vmatmul.mubr.bf16.gmra.mrb[0].mxu0 %v1355
    %v1391 = vpop.f32.mrb[0].mxu0
    %v1392 = vadd.f32 0.0, %v1391
    %v1393 = vpop.f32.mrb[0].mxu0
    %v1394 = vpop.f32.mrb[0].mxu0
    %v1395 = vpop.f32.mrb[0].mxu0
    %1396 = vdwg.mxu0
    %v1397 = vmax.f32 %v1392, 0.0
    %v1398 = vpack.c.bf16 %v1397, %v1397
    %s1399 = scalar_lea.vmem [#allocation7], 176
    %v1400 = vld [vmem:[%s1399] sm:$0xf]
    %v1401 = vld [vmem:[%s1399 + $0x4] sm:$0xf]
    %v1402 = vld [vmem:[%s1399 + $0x8] sm:$0xf]
    %v1403 = vld [vmem:[%s1399 + $0xc] sm:$0xf]
    %v1408 = vunpack.c.l.b16 %v1400
    %v1409 = vunpack.c.l.b16 %v1401
    %v1410 = vunpack.c.l.b16 %v1402
    %v1411 = vunpack.c.l.b16 %v1403
    %v1412 = vpack.c.b16 %v1409, %v1408
    %v1413 = vpack.c.b16 %v1411, %v1410
    %v1417 = vsel %vm271, %v1398, 0
    %1419 = vmatprep.subr.bf16.mxu0 0
    %1420 = vmatpush1.bf16.msra.mxu0 %v1412
    %1421 = vmatprep.subr.bf16.mxu0 0
    %1422 = vmatpush1.bf16.msra.mxu0 %v1413
    %1423 = vmatprep.subr.bf16.mxu0 0
    %1424 = vmatpush1.bf16.msra.mxu0 0
    %1425 = vmatprep.subr.bf16.mxu0 0
    %1426 = vmatpush1.bf16.msra.mxu0 0
    %1427 = vmatprep.subr.bf16.mxu0 0
    %1428 = vmatpush1.bf16.msra.mxu0 0
    %1429 = vmatprep.subr.bf16.mxu0 0
    %1430 = vmatpush1.bf16.msra.mxu0 0
    %1431 = vmatprep.subr.bf16.mxu0 0
    %1432 = vmatpush1.bf16.msra.mxu0 0
    %1433 = vmatprep.subr.bf16.mxu0 0
    %1434 = vmatpush1.bf16.msra.mxu0 0
    %1435 = vmatprep.subr.bf16.mxu0 0
    %1436 = vmatpush1.bf16.msra.mxu0 0
    %1437 = vmatprep.subr.bf16.mxu0 0
    %1438 = vmatpush1.bf16.msra.mxu0 0
    %1439 = vmatprep.subr.bf16.mxu0 0
    %1440 = vmatpush1.bf16.msra.mxu0 0
    %1441 = vmatprep.subr.bf16.mxu0 0
    %1442 = vmatpush1.bf16.msra.mxu0 0
    %1443 = vmatprep.subr.bf16.mxu0 0
    %1444 = vmatpush1.bf16.msra.mxu0 0
    %1445 = vmatprep.subr.bf16.mxu0 0
    %1446 = vmatpush1.bf16.msra.mxu0 0
    %1447 = vmatprep.subr.bf16.mxu0 0
    %1448 = vmatpush1.bf16.msra.mxu0 0
    %1449 = vmatprep.subr.bf16.mxu0 0
    %1450 = vmatpush1.bf16.msra.mxu0 0
    %1451 = vmatprep.mubr.bf16.mxu0 0
    %1452 = vmatmul.mubr.bf16.gmra.mrb[0].mxu0 %v1417
    %v1453 = vpop.f32.mrb[0].mxu0
    %v1454 = vadd.f32 0.0, %v1453
    %v1455 = vpop.f32.mrb[0].mxu0
    %v1456 = vpop.f32.mrb[0].mxu0
    %v1457 = vpop.f32.mrb[0].mxu0
    %1458 = vdwg.mxu0
    %v1459 = vadd.f32 %v1350, %v1454
    %s1460 = scalar_lea.vmem [#allocation2], 24
    %v1461 = vld [vmem:[%s1460] sm:$0x3]
    %v1462 = vpack.c.bf16 %v1461, %v1461
    %v1464 = vsel %vm152, %v1462, 0
    %1466 = vmatprep.subr.bf16.mxu0 0
    %1467 = vmatpush1.bf16.msra.mxu0 %v158
    %1468 = vmatprep.subr.bf16.mxu0 0
    %1469 = vmatpush1.bf16.msra.mxu0 0
    %1470 = vmatprep.subr.bf16.mxu0 0
    %1471 = vmatpush1.bf16.msra.mxu0 0
    %1472 = vmatprep.subr.bf16.mxu0 0
    %1473 = vmatpush1.bf16.msra.mxu0 0
    %1474 = vmatprep.subr.bf16.mxu0 0
    %1475 = vmatpush1.bf16.msra.mxu0 0
    %1476 = vmatprep.subr.bf16.mxu0 0
    %1477 = vmatpush1.bf16.msra.mxu0 0
    %1478 = vmatprep.subr.bf16.mxu0 0
    %1479 = vmatpush1.bf16.msra.mxu0 0
    %1480 = vmatprep.subr.bf16.mxu0 0
    %1481 = vmatpush1.bf16.msra.mxu0 0
    %1482 = vmatprep.subr.bf16.mxu0 0
    %1483 = vmatpush1.bf16.msra.mxu0 0
    %1484 = vmatprep.subr.bf16.mxu0 0
    %1485 = vmatpush1.bf16.msra.mxu0 0
    %1486 = vmatprep.subr.bf16.mxu0 0
    %1487 = vmatpush1.bf16.msra.mxu0 0
    %1488 = vmatprep.subr.bf16.mxu0 0
    %1489 = vmatpush1.bf16.msra.mxu0 0
    %1490 = vmatprep.subr.bf16.mxu0 0
    %1491 = vmatpush1.bf16.msra.mxu0 0
    %1492 = vmatprep.subr.bf16.mxu0 0
    %1493 = vmatpush1.bf16.msra.mxu0 0
    %1494 = vmatprep.subr.bf16.mxu0 0
    %1495 = vmatpush1.bf16.msra.mxu0 0
    %1496 = vmatprep.subr.bf16.mxu0 0
    %1497 = vmatpush1.bf16.msra.mxu0 0
    %1498 = vmatprep.mubr.bf16.mxu0 0
    %1499 = vmatmul.mubr.bf16.gmra.mrb[0].mxu0 %v1464
    %v1500 = vpop.f32.mrb[0].mxu0
    %v1501 = vadd.f32 0.0, %v1500
    %v1502 = vpop.f32.mrb[0].mxu0
    %v1503 = vpop.f32.mrb[0].mxu0
    %v1504 = vpop.f32.mrb[0].mxu0
    %1505 = vdwg.mxu0
    %v1506 = vmax.f32 %v1501, 0.0
    %v1507 = vpack.c.bf16 %v1506, %v1506
    %s1508 = scalar_lea.vmem [#allocation7], 192
    %v1509 = vld [vmem:[%s1508] sm:$0xf]
    %v1510 = vld [vmem:[%s1508 + $0x4] sm:$0xf]
    %v1511 = vld [vmem:[%s1508 + $0x8] sm:$0xf]
    %v1512 = vld [vmem:[%s1508 + $0xc] sm:$0xf]
    %v1517 = vunpack.c.l.b16 %v1509
    %v1518 = vunpack.c.l.b16 %v1510
    %v1519 = vunpack.c.l.b16 %v1511
    %v1520 = vunpack.c.l.b16 %v1512
    %v1521 = vpack.c.b16 %v1518, %v1517
    %v1522 = vpack.c.b16 %v1520, %v1519
    %v1526 = vsel %vm271, %v1507, 0
    %1528 = vmatprep.subr.bf16.mxu0 0
    %1529 = vmatpush1.bf16.msra.mxu0 %v1521
    %1530 = vmatprep.subr.bf16.mxu0 0
    %1531 = vmatpush1.bf16.msra.mxu0 %v1522
    %1532 = vmatprep.subr.bf16.mxu0 0
    %1533 = vmatpush1.bf16.msra.mxu0 0
    %1534 = vmatprep.subr.bf16.mxu0 0
    %1535 = vmatpush1.bf16.msra.mxu0 0
    %1536 = vmatprep.subr.bf16.mxu0 0
    %1537 = vmatpush1.bf16.msra.mxu0 0
    %1538 = vmatprep.subr.bf16.mxu0 0
    %1539 = vmatpush1.bf16.msra.mxu0 0
    %1540 = vmatprep.subr.bf16.mxu0 0
    %1541 = vmatpush1.bf16.msra.mxu0 0
    %1542 = vmatprep.subr.bf16.mxu0 0
    %1543 = vmatpush1.bf16.msra.mxu0 0
    %1544 = vmatprep.subr.bf16.mxu0 0
    %1545 = vmatpush1.bf16.msra.mxu0 0
    %1546 = vmatprep.subr.bf16.mxu0 0
    %1547 = vmatpush1.bf16.msra.mxu0 0
    %1548 = vmatprep.subr.bf16.mxu0 0
    %1549 = vmatpush1.bf16.msra.mxu0 0
    %1550 = vmatprep.subr.bf16.mxu0 0
    %1551 = vmatpush1.bf16.msra.mxu0 0
    %1552 = vmatprep.subr.bf16.mxu0 0
    %1553 = vmatpush1.bf16.msra.mxu0 0
    %1554 = vmatprep.subr.bf16.mxu0 0
    %1555 = vmatpush1.bf16.msra.mxu0 0
    %1556 = vmatprep.subr.bf16.mxu0 0
    %1557 = vmatpush1.bf16.msra.mxu0 0
    %1558 = vmatprep.subr.bf16.mxu0 0
    %1559 = vmatpush1.bf16.msra.mxu0 0
    %1560 = vmatprep.mubr.bf16.mxu0 0
    %1561 = vmatmul.mubr.bf16.gmra.mrb[0].mxu0 %v1526
    %v1562 = vpop.f32.mrb[0].mxu0
    %v1563 = vadd.f32 0.0, %v1562
    %v1564 = vpop.f32.mrb[0].mxu0
    %v1565 = vpop.f32.mrb[0].mxu0
    %v1566 = vpop.f32.mrb[0].mxu0
    %1567 = vdwg.mxu0
    %v1568 = vadd.f32 %v1459, %v1563
    %s1569 = scalar_lea.vmem [#allocation2], 26
    %v1570 = vld [vmem:[%s1569] sm:$0x3]
    %v1571 = vpack.c.bf16 %v1570, %v1570
    %v1573 = vsel %vm152, %v1571, 0
    %1575 = vmatprep.subr.bf16.mxu0 0
    %1576 = vmatpush1.bf16.msra.mxu0 %v158
    %1577 = vmatprep.subr.bf16.mxu0 0
    %1578 = vmatpush1.bf16.msra.mxu0 0
    %1579 = vmatprep.subr.bf16.mxu0 0
    %1580 = vmatpush1.bf16.msra.mxu0 0
    %1581 = vmatprep.subr.bf16.mxu0 0
    %1582 = vmatpush1.bf16.msra.mxu0 0
    %1583 = vmatprep.subr.bf16.mxu0 0
    %1584 = vmatpush1.bf16.msra.mxu0 0
    %1585 = vmatprep.subr.bf16.mxu0 0
    %1586 = vmatpush1.bf16.msra.mxu0 0
    %1587 = vmatprep.subr.bf16.mxu0 0
    %1588 = vmatpush1.bf16.msra.mxu0 0
    %1589 = vmatprep.subr.bf16.mxu0 0
    %1590 = vmatpush1.bf16.msra.mxu0 0
    %1591 = vmatprep.subr.bf16.mxu0 0
    %1592 = vmatpush1.bf16.msra.mxu0 0
    %1593 = vmatprep.subr.bf16.mxu0 0
    %1594 = vmatpush1.bf16.msra.mxu0 0
    %1595 = vmatprep.subr.bf16.mxu0 0
    %1596 = vmatpush1.bf16.msra.mxu0 0
    %1597 = vmatprep.subr.bf16.mxu0 0
    %1598 = vmatpush1.bf16.msra.mxu0 0
    %1599 = vmatprep.subr.bf16.mxu0 0
    %1600 = vmatpush1.bf16.msra.mxu0 0
    %1601 = vmatprep.subr.bf16.mxu0 0
    %1602 = vmatpush1.bf16.msra.mxu0 0
    %1603 = vmatprep.subr.bf16.mxu0 0
    %1604 = vmatpush1.bf16.msra.mxu0 0
    %1605 = vmatprep.subr.bf16.mxu0 0
    %1606 = vmatpush1.bf16.msra.mxu0 0
    %1607 = vmatprep.mubr.bf16.mxu0 0
    %1608 = vmatmul.mubr.bf16.gmra.mrb[0].mxu0 %v1573
    %v1609 = vpop.f32.mrb[0].mxu0
    %v1610 = vadd.f32 0.0, %v1609
    %v1611 = vpop.f32.mrb[0].mxu0
    %v1612 = vpop.f32.mrb[0].mxu0
    %v1613 = vpop.f32.mrb[0].mxu0
    %1614 = vdwg.mxu0
    %v1615 = vmax.f32 %v1610, 0.0
    %v1616 = vpack.c.bf16 %v1615, %v1615
    %s1617 = scalar_lea.vmem [#allocation7], 208
    %v1618 = vld [vmem:[%s1617] sm:$0xf]
    %v1619 = vld [vmem:[%s1617 + $0x4] sm:$0xf]
    %v1620 = vld [vmem:[%s1617 + $0x8] sm:$0xf]
    %v1621 = vld [vmem:[%s1617 + $0xc] sm:$0xf]
    %v1626 = vunpack.c.l.b16 %v1618
    %v1627 = vunpack.c.l.b16 %v1619
    %v1628 = vunpack.c.l.b16 %v1620
    %v1629 = vunpack.c.l.b16 %v1621
    %v1630 = vpack.c.b16 %v1627, %v1626
    %v1631 = vpack.c.b16 %v1629, %v1628
    %v1635 = vsel %vm271, %v1616, 0
    %1637 = vmatprep.subr.bf16.mxu0 0
    %1638 = vmatpush1.bf16.msra.mxu0 %v1630
    %1639 = vmatprep.subr.bf16.mxu0 0
    %1640 = vmatpush1.bf16.msra.mxu0 %v1631
    %1641 = vmatprep.subr.bf16.mxu0 0
    %1642 = vmatpush1.bf16.msra.mxu0 0
    %1643 = vmatprep.subr.bf16.mxu0 0
    %1644 = vmatpush1.bf16.msra.mxu0 0
    %1645 = vmatprep.subr.bf16.mxu0 0
    %1646 = vmatpush1.bf16.msra.mxu0 0
    %1647 = vmatprep.subr.bf16.mxu0 0
    %1648 = vmatpush1.bf16.msra.mxu0 0
    %1649 = vmatprep.subr.bf16.mxu0 0
    %1650 = vmatpush1.bf16.msra.mxu0 0
    %1651 = vmatprep.subr.bf16.mxu0 0
    %1652 = vmatpush1.bf16.msra.mxu0 0
    %1653 = vmatprep.subr.bf16.mxu0 0
    %1654 = vmatpush1.bf16.msra.mxu0 0
    %1655 = vmatprep.subr.bf16.mxu0 0
    %1656 = vmatpush1.bf16.msra.mxu0 0
    %1657 = vmatprep.subr.bf16.mxu0 0
    %1658 = vmatpush1.bf16.msra.mxu0 0
    %1659 = vmatprep.subr.bf16.mxu0 0
    %1660 = vmatpush1.bf16.msra.mxu0 0
    %1661 = vmatprep.subr.bf16.mxu0 0
    %1662 = vmatpush1.bf16.msra.mxu0 0
    %1663 = vmatprep.subr.bf16.mxu0 0
    %1664 = vmatpush1.bf16.msra.mxu0 0
    %1665 = vmatprep.subr.bf16.mxu0 0
    %1666 = vmatpush1.bf16.msra.mxu0 0
    %1667 = vmatprep.subr.bf16.mxu0 0
    %1668 = vmatpush1.bf16.msra.mxu0 0
    %1669 = vmatprep.mubr.bf16.mxu0 0
    %1670 = vmatmul.mubr.bf16.gmra.mrb[0].mxu0 %v1635
    %v1671 = vpop.f32.mrb[0].mxu0
    %v1672 = vadd.f32 0.0, %v1671
    %v1673 = vpop.f32.mrb[0].mxu0
    %v1674 = vpop.f32.mrb[0].mxu0
    %v1675 = vpop.f32.mrb[0].mxu0
    %1676 = vdwg.mxu0
    %v1677 = vadd.f32 %v1568, %v1672
    %s1678 = scalar_lea.vmem [#allocation2], 28
    %v1679 = vld [vmem:[%s1678] sm:$0x3]
    %v1680 = vpack.c.bf16 %v1679, %v1679
    %v1682 = vsel %vm152, %v1680, 0
    %1684 = vmatprep.subr.bf16.mxu0 0
    %1685 = vmatpush1.bf16.msra.mxu0 %v158
    %1686 = vmatprep.subr.bf16.mxu0 0
    %1687 = vmatpush1.bf16.msra.mxu0 0
    %1688 = vmatprep.subr.bf16.mxu0 0
    %1689 = vmatpush1.bf16.msra.mxu0 0
    %1690 = vmatprep.subr.bf16.mxu0 0
    %1691 = vmatpush1.bf16.msra.mxu0 0
    %1692 = vmatprep.subr.bf16.mxu0 0
    %1693 = vmatpush1.bf16.msra.mxu0 0
    %1694 = vmatprep.subr.bf16.mxu0 0
    %1695 = vmatpush1.bf16.msra.mxu0 0
    %1696 = vmatprep.subr.bf16.mxu0 0
    %1697 = vmatpush1.bf16.msra.mxu0 0
    %1698 = vmatprep.subr.bf16.mxu0 0
    %1699 = vmatpush1.bf16.msra.mxu0 0
    %1700 = vmatprep.subr.bf16.mxu0 0
    %1701 = vmatpush1.bf16.msra.mxu0 0
    %1702 = vmatprep.subr.bf16.mxu0 0
    %1703 = vmatpush1.bf16.msra.mxu0 0
    %1704 = vmatprep.subr.bf16.mxu0 0
    %1705 = vmatpush1.bf16.msra.mxu0 0
    %1706 = vmatprep.subr.bf16.mxu0 0
    %1707 = vmatpush1.bf16.msra.mxu0 0
    %1708 = vmatprep.subr.bf16.mxu0 0
    %1709 = vmatpush1.bf16.msra.mxu0 0
    %1710 = vmatprep.subr.bf16.mxu0 0
    %1711 = vmatpush1.bf16.msra.mxu0 0
    %1712 = vmatprep.subr.bf16.mxu0 0
    %1713 = vmatpush1.bf16.msra.mxu0 0
    %1714 = vmatprep.subr.bf16.mxu0 0
    %1715 = vmatpush1.bf16.msra.mxu0 0
    %1716 = vmatprep.mubr.bf16.mxu0 0
    %1717 = vmatmul.mubr.bf16.gmra.mrb[0].mxu0 %v1682
    %v1718 = vpop.f32.mrb[0].mxu0
    %v1719 = vadd.f32 0.0, %v1718
    %v1720 = vpop.f32.mrb[0].mxu0
    %v1721 = vpop.f32.mrb[0].mxu0
    %v1722 = vpop.f32.mrb[0].mxu0
    %1723 = vdwg.mxu0
    %v1724 = vmax.f32 %v1719, 0.0
    %v1725 = vpack.c.bf16 %v1724, %v1724
    %s1726 = scalar_lea.vmem [#allocation7], 224
    %v1727 = vld [vmem:[%s1726] sm:$0xf]
    %v1728 = vld [vmem:[%s1726 + $0x4] sm:$0xf]
    %v1729 = vld [vmem:[%s1726 + $0x8] sm:$0xf]
    %v1730 = vld [vmem:[%s1726 + $0xc] sm:$0xf]
    %v1735 = vunpack.c.l.b16 %v1727
    %v1736 = vunpack.c.l.b16 %v1728
    %v1737 = vunpack.c.l.b16 %v1729
    %v1738 = vunpack.c.l.b16 %v1730
    %v1739 = vpack.c.b16 %v1736, %v1735
    %v1740 = vpack.c.b16 %v1738, %v1737
    %v1744 = vsel %vm271, %v1725, 0
    %1746 = vmatprep.subr.bf16.mxu0 0
    %1747 = vmatpush1.bf16.msra.mxu0 %v1739
    %1748 = vmatprep.subr.bf16.mxu0 0
    %1749 = vmatpush1.bf16.msra.mxu0 %v1740
    %1750 = vmatprep.subr.bf16.mxu0 0
    %1751 = vmatpush1.bf16.msra.mxu0 0
    %1752 = vmatprep.subr.bf16.mxu0 0
    %1753 = vmatpush1.bf16.msra.mxu0 0
    %1754 = vmatprep.subr.bf16.mxu0 0
    %1755 = vmatpush1.bf16.msra.mxu0 0
    %1756 = vmatprep.subr.bf16.mxu0 0
    %1757 = vmatpush1.bf16.msra.mxu0 0
    %1758 = vmatprep.subr.bf16.mxu0 0
    %1759 = vmatpush1.bf16.msra.mxu0 0
    %1760 = vmatprep.subr.bf16.mxu0 0
    %1761 = vmatpush1.bf16.msra.mxu0 0
    %1762 = vmatprep.subr.bf16.mxu0 0
    %1763 = vmatpush1.bf16.msra.mxu0 0
    %1764 = vmatprep.subr.bf16.mxu0 0
    %1765 = vmatpush1.bf16.msra.mxu0 0
    %1766 = vmatprep.subr.bf16.mxu0 0
    %1767 = vmatpush1.bf16.msra.mxu0 0
    %1768 = vmatprep.subr.bf16.mxu0 0
    %1769 = vmatpush1.bf16.msra.mxu0 0
    %1770 = vmatprep.subr.bf16.mxu0 0
    %1771 = vmatpush1.bf16.msra.mxu0 0
    %1772 = vmatprep.subr.bf16.mxu0 0
    %1773 = vmatpush1.bf16.msra.mxu0 0
    %1774 = vmatprep.subr.bf16.mxu0 0
    %1775 = vmatpush1.bf16.msra.mxu0 0
    %1776 = vmatprep.subr.bf16.mxu0 0
    %1777 = vmatpush1.bf16.msra.mxu0 0
    %1778 = vmatprep.mubr.bf16.mxu0 0
    %1779 = vmatmul.mubr.bf16.gmra.mrb[0].mxu0 %v1744
    %v1780 = vpop.f32.mrb[0].mxu0
    %v1781 = vadd.f32 0.0, %v1780
    %v1782 = vpop.f32.mrb[0].mxu0
    %v1783 = vpop.f32.mrb[0].mxu0
    %v1784 = vpop.f32.mrb[0].mxu0
    %1785 = vdwg.mxu0
    %v1786 = vadd.f32 %v1677, %v1781
    %s1787 = scalar_lea.vmem [#allocation2], 30
    %v1788 = vld [vmem:[%s1787] sm:$0x3]
    %v1789 = vpack.c.bf16 %v1788, %v1788
    %v1791 = vsel %vm152, %v1789, 0
    %1793 = vmatprep.subr.bf16.mxu0 0
    %1794 = vmatpush1.bf16.msra.mxu0 %v158
    %1795 = vmatprep.subr.bf16.mxu0 0
    %1796 = vmatpush1.bf16.msra.mxu0 0
    %1797 = vmatprep.subr.bf16.mxu0 0
    %1798 = vmatpush1.bf16.msra.mxu0 0
    %1799 = vmatprep.subr.bf16.mxu0 0
    %1800 = vmatpush1.bf16.msra.mxu0 0
    %1801 = vmatprep.subr.bf16.mxu0 0
    %1802 = vmatpush1.bf16.msra.mxu0 0
    %1803 = vmatprep.subr.bf16.mxu0 0
    %1804 = vmatpush1.bf16.msra.mxu0 0
    %1805 = vmatprep.subr.bf16.mxu0 0
    %1806 = vmatpush1.bf16.msra.mxu0 0
    %1807 = vmatprep.subr.bf16.mxu0 0
    %1808 = vmatpush1.bf16.msra.mxu0 0
    %1809 = vmatprep.subr.bf16.mxu0 0
    %1810 = vmatpush1.bf16.msra.mxu0 0
    %1811 = vmatprep.subr.bf16.mxu0 0
    %1812 = vmatpush1.bf16.msra.mxu0 0
    %1813 = vmatprep.subr.bf16.mxu0 0
    %1814 = vmatpush1.bf16.msra.mxu0 0
    %1815 = vmatprep.subr.bf16.mxu0 0
    %1816 = vmatpush1.bf16.msra.mxu0 0
    %1817 = vmatprep.subr.bf16.mxu0 0
    %1818 = vmatpush1.bf16.msra.mxu0 0
    %1819 = vmatprep.subr.bf16.mxu0 0
    %1820 = vmatpush1.bf16.msra.mxu0 0
    %1821 = vmatprep.subr.bf16.mxu0 0
    %1822 = vmatpush1.bf16.msra.mxu0 0
    %1823 = vmatprep.subr.bf16.mxu0 0
    %1824 = vmatpush1.bf16.msra.mxu0 0
    %1825 = vmatprep.mubr.bf16.mxu0 0
    %1826 = vmatmul.mubr.bf16.gmra.mrb[0].mxu0 %v1791
    %v1827 = vpop.f32.mrb[0].mxu0
    %v1828 = vadd.f32 0.0, %v1827
    %v1829 = vpop.f32.mrb[0].mxu0
    %v1830 = vpop.f32.mrb[0].mxu0
    %v1831 = vpop.f32.mrb[0].mxu0
    %1832 = vdwg.mxu0
    %v1833 = vmax.f32 %v1828, 0.0
    %v1834 = vpack.c.bf16 %v1833, %v1833
    %s1835 = scalar_lea.vmem [#allocation7], 240
    %v1836 = vld [vmem:[%s1835] sm:$0xf]
    %v1837 = vld [vmem:[%s1835 + $0x4] sm:$0xf]
    %v1838 = vld [vmem:[%s1835 + $0x8] sm:$0xf]
    %v1839 = vld [vmem:[%s1835 + $0xc] sm:$0xf]
    %v1844 = vunpack.c.l.b16 %v1836
    %v1845 = vunpack.c.l.b16 %v1837
    %v1846 = vunpack.c.l.b16 %v1838
    %v1847 = vunpack.c.l.b16 %v1839
    %v1848 = vpack.c.b16 %v1845, %v1844
    %v1849 = vpack.c.b16 %v1847, %v1846
    %v1853 = vsel %vm271, %v1834, 0
    %1855 = vmatprep.subr.bf16.mxu0 0
    %1856 = vmatpush1.bf16.msra.mxu0 %v1848
    %1857 = vmatprep.subr.bf16.mxu0 0
    %1858 = vmatpush1.bf16.msra.mxu0 %v1849
    %1859 = vmatprep.subr.bf16.mxu0 0
    %1860 = vmatpush1.bf16.msra.mxu0 0
    %1861 = vmatprep.subr.bf16.mxu0 0
    %1862 = vmatpush1.bf16.msra.mxu0 0
    %1863 = vmatprep.subr.bf16.mxu0 0
    %1864 = vmatpush1.bf16.msra.mxu0 0
    %1865 = vmatprep.subr.bf16.mxu0 0
    %1866 = vmatpush1.bf16.msra.mxu0 0
    %1867 = vmatprep.subr.bf16.mxu0 0
    %1868 = vmatpush1.bf16.msra.mxu0 0
    %1869 = vmatprep.subr.bf16.mxu0 0
    %1870 = vmatpush1.bf16.msra.mxu0 0
    %1871 = vmatprep.subr.bf16.mxu0 0
    %1872 = vmatpush1.bf16.msra.mxu0 0
    %1873 = vmatprep.subr.bf16.mxu0 0
    %1874 = vmatpush1.bf16.msra.mxu0 0
    %1875 = vmatprep.subr.bf16.mxu0 0
    %1876 = vmatpush1.bf16.msra.mxu0 0
    %1877 = vmatprep.subr.bf16.mxu0 0
    %1878 = vmatpush1.bf16.msra.mxu0 0
    %1879 = vmatprep.subr.bf16.mxu0 0
    %1880 = vmatpush1.bf16.msra.mxu0 0
    %1881 = vmatprep.subr.bf16.mxu0 0
    %1882 = vmatpush1.bf16.msra.mxu0 0
    %1883 = vmatprep.subr.bf16.mxu0 0
    %1884 = vmatpush1.bf16.msra.mxu0 0
    %1885 = vmatprep.subr.bf16.mxu0 0
    %1886 = vmatpush1.bf16.msra.mxu0 0
    %1887 = vmatprep.mubr.bf16.mxu0 0
    %1888 = vmatmul.mubr.bf16.gmra.mrb[0].mxu0 %v1853
    %v1889 = vpop.f32.mrb[0].mxu0
    %v1890 = vadd.f32 0.0, %v1889
    %v1891 = vpop.f32.mrb[0].mxu0
    %v1892 = vpop.f32.mrb[0].mxu0
    %v1893 = vpop.f32.mrb[0].mxu0
    %1894 = vdwg.mxu0
    %v1895 = vadd.f32 %v1786, %v1890
    %v1896 = vld [vmem:[#allocation8] sm:$0x1]
    %v1898 = vlaneseq
    %v1899 = vshrl.u32 %v1898, 7
    %v1900 = vsub.s32 0, %v1899
    %v1901 = vrot.slane %v1896, %v1900
    %v1903 = vadd.f32 %v1895, %v1901
    %v1904 = vmax.f32 %v1903, 0.0
    %v1905 = vpack.c.bf16 %v1904, %v1904
    %v1906 = vld [vmem:[#allocation10] sm:$0xff]
    %v1907 = vld [vmem:[#allocation10 + $0x8] sm:$0xf]
    %v1908 = vld [vmem:[#allocation10 + $0xc] sm:$0xff]
    %v1909 = vld [vmem:[#allocation10 + $0x14] sm:$0xf]
    %v1910 = vld [vmem:[#allocation10 + $0x18] sm:$0xff]
    %v1911 = vld [vmem:[#allocation10 + $0x20] sm:$0xf]
    %v1912 = vld [vmem:[#allocation10 + $0x24] sm:$0xff]
    %v1913 = vld [vmem:[#allocation10 + $0x2c] sm:$0xf]
    %v1914 = vld [vmem:[#allocation11] sm:$0x7]
    %v1916 = vlaneseq
    %v1917 = vshrl.u32 %v1916, 7
    %v1918 = vsub.s32 0, %v1917
    %v1919 = vrot.slane %v1914, %v1918
    %v1920 = vlaneseq
    %v1921 = vshrl.u32 %v1920, 7
    %v1922 = vsub.s32 1, %v1921
    %v1923 = vrot.slane %v1914, %v1922
    %v1924 = vlaneseq
    %v1925 = vshrl.u32 %v1924, 7
    %v1926 = vsub.s32 2, %v1925
    %v1927 = vrot.slane %v1914, %v1926
    %v1939 = vunpack.c.l.b16 %v1906
    %v1940 = vunpack.c.h.b16 %v1906
    %v1941 = vunpack.c.l.b16 %v1907
    %v1942 = vunpack.c.l.b16 %v1908
    %v1943 = vunpack.c.h.b16 %v1908
    %v1944 = vunpack.c.l.b16 %v1909
    %v1945 = vunpack.c.l.b16 %v1910
    %v1946 = vunpack.c.h.b16 %v1910
    %v1947 = vunpack.c.l.b16 %v1911
    %v1948 = vunpack.c.l.b16 %v1912
    %v1949 = vunpack.c.h.b16 %v1912
    %v1950 = vunpack.c.l.b16 %v1913
    %v1951 = vpack.c.b16 %v1942, %v1939
    %v1952 = vpack.c.b16 %v1943, %v1940
    %v1953 = vpack.c.b16 %v1944, %v1941
    %v1954 = vpack.c.b16 %v1948, %v1945
    %v1955 = vpack.c.b16 %v1949, %v1946
    %v1956 = vpack.c.b16 %v1950, %v1947
    %v1964 = vsel %vm271, %v1905, 0
    %1966 = vmatprep.subr.bf16.mxu0 %v1952
    %1967 = vmatpush1.bf16.msra.mxu0 %v1951
    %1968 = vmatprep.subr.bf16.mxu0 %v1955
    %1969 = vmatpush1.bf16.msra.mxu0 %v1954
    %1970 = vmatprep.subr.bf16.mxu0 0
    %1971 = vmatpush1.bf16.msra.mxu0 0
    %1972 = vmatprep.subr.bf16.mxu0 0
    %1973 = vmatpush1.bf16.msra.mxu0 0
    %1974 = vmatprep.subr.bf16.mxu0 0
    %1975 = vmatpush1.bf16.msra.mxu0 0
    %1976 = vmatprep.subr.bf16.mxu0 0
    %1977 = vmatpush1.bf16.msra.mxu0 0
    %1978 = vmatprep.subr.bf16.mxu0 0
    %1979 = vmatpush1.bf16.msra.mxu0 0
    %1980 = vmatprep.subr.bf16.mxu0 0
    %1981 = vmatpush1.bf16.msra.mxu0 0
    %1982 = vmatprep.subr.bf16.mxu0 0
    %1983 = vmatpush1.bf16.msra.mxu0 0
    %1984 = vmatprep.subr.bf16.mxu0 0
    %1985 = vmatpush1.bf16.msra.mxu0 0
    %1986 = vmatprep.subr.bf16.mxu0 0
    %1987 = vmatpush1.bf16.msra.mxu0 0
    %1988 = vmatprep.subr.bf16.mxu0 0
    %1989 = vmatpush1.bf16.msra.mxu0 0
    %1990 = vmatprep.subr.bf16.mxu0 0
    %1991 = vmatpush1.bf16.msra.mxu0 0
    %1992 = vmatprep.subr.bf16.mxu0 0
    %1993 = vmatpush1.bf16.msra.mxu0 0
    %1994 = vmatprep.subr.bf16.mxu0 0
    %1995 = vmatpush1.bf16.msra.mxu0 0
    %1996 = vmatprep.subr.bf16.mxu0 0
    %1997 = vmatpush1.bf16.msra.mxu0 0
    %1998 = vmatprep.mubr.bf16.mxu0 0
    %1999 = vmatmul.mubr.bf16.gmra.mrb[0].mxu0 %v1964
    %v2000 = vpop.f32.mrb[0].mxu0
    %v2001 = vadd.f32 %v1919, %v2000
    %v2002 = vpop.f32.mrb[0].mxu0
    %v2003 = vadd.f32 %v1923, %v2002
    %v2004 = vpop.f32.mrb[0].mxu0
    %v2005 = vpop.f32.mrb[0].mxu0
    %2006 = vdwg.mxu0
    %2007 = vmatprep.subr.bf16.mxu0 0
    %2008 = vmatpush1.bf16.msra.mxu0 %v1953
    %2009 = vmatprep.subr.bf16.mxu0 0
    %2010 = vmatpush1.bf16.msra.mxu0 %v1956
    %2011 = vmatprep.subr.bf16.mxu0 0
    %2012 = vmatpush1.bf16.msra.mxu0 0
    %2013 = vmatprep.subr.bf16.mxu0 0
    %2014 = vmatpush1.bf16.msra.mxu0 0
    %2015 = vmatprep.subr.bf16.mxu0 0
    %2016 = vmatpush1.bf16.msra.mxu0 0
    %2017 = vmatprep.subr.bf16.mxu0 0
    %2018 = vmatpush1.bf16.msra.mxu0 0
    %2019 = vmatprep.subr.bf16.mxu0 0
    %2020 = vmatpush1.bf16.msra.mxu0 0
    %2021 = vmatprep.subr.bf16.mxu0 0
    %2022 = vmatpush1.bf16.msra.mxu0 0
    %2023 = vmatprep.subr.bf16.mxu0 0
    %2024 = vmatpush1.bf16.msra.mxu0 0
    %2025 = vmatprep.subr.bf16.mxu0 0
    %2026 = vmatpush1.bf16.msra.mxu0 0
    %2027 = vmatprep.subr.bf16.mxu0 0
    %2028 = vmatpush1.bf16.msra.mxu0 0
    %2029 = vmatprep.subr.bf16.mxu0 0
    %2030 = vmatpush1.bf16.msra.mxu0 0
    %2031 = vmatprep.subr.bf16.mxu0 0
    %2032 = vmatpush1.bf16.msra.mxu0 0
    %2033 = vmatprep.subr.bf16.mxu0 0
    %2034 = vmatpush1.bf16.msra.mxu0 0
    %2035 = vmatprep.subr.bf16.mxu0 0
    %2036 = vmatpush1.bf16.msra.mxu0 0
    %2037 = vmatprep.subr.bf16.mxu0 0
    %2038 = vmatpush1.bf16.msra.mxu0 0
    %2039 = vmatprep.mubr.bf16.mxu0 0
    %2040 = vmatmul.mubr.bf16.gmra.mrb[0].mxu0 %v1964
    %v2041 = vpop.f32.mrb[0].mxu0
    %v2042 = vadd.f32 %v1927, %v2041
    %v2043 = vpop.f32.mrb[0].mxu0
    %v2044 = vpop.f32.mrb[0].mxu0
    %v2045 = vpop.f32.mrb[0].mxu0
    %2046 = vdwg.mxu0
    %v2047 = vxor.u32 %v2001, 2147483648
    %v2048 = vmul.f32 %v2047, 1.442695
    %v2049 = vpow.pop %v2048
    %v2050 = vadd.f32 %v2049, 1.0
    %v2051 = vrcp.pop %v2050
    %v2052 = vmul.f32 1.0, %v2051
    %v2053 = vxor.u32 %v2003, 2147483648
    %v2054 = vmul.f32 %v2053, 1.442695
    %v2055 = vpow.pop %v2054
    %v2056 = vadd.f32 %v2055, 1.0
    %v2057 = vrcp.pop %v2056
    %v2058 = vmul.f32 1.0, %v2057
    %v2059 = vld [vmem:[#allocation13] sm:$0x1]
    %v2061 = vlaneseq
    %v2062 = vshrl.u32 %v2061, 7
    %v2063 = vsub.s32 0, %v2062
    %v2064 = vrot.slane %v2059, %v2063
    %v2066 = vmul.f32 %v2052, %v2064
    %v2067 = vadd.f32 %v2042, %v2066
    %v2068 = vtanh.pop %v2067
    %v2069 = vsub.f32 1.0, %v2058
    %v2070 = vmul.f32 %v2069, %v2068
    %2071 = vst [vmem:[#allocation18] sm:$0x3] %v2070
    %v2072 = vpack.c.bf16 %v2070, %v2070
    %v2073 = vld [vmem:[#allocation14] sm:$0xf]
    %v2074 = vld [vmem:[#allocation14 + $0x4] sm:$0xf]
    %v2075 = vld [vmem:[#allocation14 + $0x8] sm:$0xf]
    %v2076 = vld [vmem:[#allocation14 + $0xc] sm:$0xf]
    %v2077 = vld [vmem:[#allocation14 + $0x10] sm:$0xf]
    %v2078 = vld [vmem:[#allocation14 + $0x14] sm:$0xf]
    %v2079 = vld [vmem:[#allocation14 + $0x18] sm:$0xf]
    %v2080 = vld [vmem:[#allocation14 + $0x1c] sm:$0xf]
    %v2081 = vld [vmem:[#allocation14 + $0x20] sm:$0xf]
    %v2082 = vld [vmem:[#allocation14 + $0x24] sm:$0xf]
    %v2083 = vld [vmem:[#allocation14 + $0x28] sm:$0xf]
    %v2084 = vld [vmem:[#allocation14 + $0x2c] sm:$0xf]
    %v2085 = vld [vmem:[#allocation14 + $0x30] sm:$0xf]
    %v2086 = vld [vmem:[#allocation14 + $0x34] sm:$0xf]
    %v2087 = vld [vmem:[#allocation14 + $0x38] sm:$0xf]
    %v2088 = vld [vmem:[#allocation14 + $0x3c] sm:$0xf]
    %v2089 = vld [vmem:[#allocation16] sm:$0x1]
    %v2091 = vlaneseq
    %v2092 = vshrl.u32 %v2091, 7
    %v2093 = vsub.s32 0, %v2092
    %v2094 = vrot.slane %v2089, %v2093
    %v2112 = vunpack.c.l.b16 %v2073
    %v2113 = vunpack.c.l.b16 %v2074
    %v2114 = vunpack.c.l.b16 %v2075
    %v2115 = vunpack.c.l.b16 %v2076
    %v2116 = vunpack.c.l.b16 %v2077
    %v2117 = vunpack.c.l.b16 %v2078
    %v2118 = vunpack.c.l.b16 %v2079
    %v2119 = vunpack.c.l.b16 %v2080
    %v2120 = vunpack.c.l.b16 %v2081
    %v2121 = vunpack.c.l.b16 %v2082
    %v2122 = vunpack.c.l.b16 %v2083
    %v2123 = vunpack.c.l.b16 %v2084
    %v2124 = vunpack.c.l.b16 %v2085
    %v2125 = vunpack.c.l.b16 %v2086
    %v2126 = vunpack.c.l.b16 %v2087
    %v2127 = vunpack.c.l.b16 %v2088
    %v2128 = vpack.c.b16 %v2113, %v2112
    %v2129 = vpack.c.b16 %v2115, %v2114
    %v2130 = vpack.c.b16 %v2117, %v2116
    %v2131 = vpack.c.b16 %v2119, %v2118
    %v2132 = vpack.c.b16 %v2121, %v2120
    %v2133 = vpack.c.b16 %v2123, %v2122
    %v2134 = vpack.c.b16 %v2125, %v2124
    %v2135 = vpack.c.b16 %v2127, %v2126
    %2144 = vmatprep.subr.bf16.mxu0 0
    %2145 = vmatpush1.bf16.msra.mxu0 %v2128
    %2146 = vmatprep.subr.bf16.mxu0 0
    %2147 = vmatpush1.bf16.msra.mxu0 %v2129
    %2148 = vmatprep.subr.bf16.mxu0 0
    %2149 = vmatpush1.bf16.msra.mxu0 %v2130
    %2150 = vmatprep.subr.bf16.mxu0 0
    %2151 = vmatpush1.bf16.msra.mxu0 %v2131
    %2152 = vmatprep.subr.bf16.mxu0 0
    %2153 = vmatpush1.bf16.msra.mxu0 %v2132
    %2154 = vmatprep.subr.bf16.mxu0 0
    %2155 = vmatpush1.bf16.msra.mxu0 %v2133
    %2156 = vmatprep.subr.bf16.mxu0 0
    %2157 = vmatpush1.bf16.msra.mxu0 %v2134
    %2158 = vmatprep.subr.bf16.mxu0 0
    %2159 = vmatpush1.bf16.msra.mxu0 %v2135
    %2160 = vmatprep.subr.bf16.mxu0 0
    %2161 = vmatpush1.bf16.msra.mxu0 0
    %2162 = vmatprep.subr.bf16.mxu0 0
    %2163 = vmatpush1.bf16.msra.mxu0 0
    %2164 = vmatprep.subr.bf16.mxu0 0
    %2165 = vmatpush1.bf16.msra.mxu0 0
    %2166 = vmatprep.subr.bf16.mxu0 0
    %2167 = vmatpush1.bf16.msra.mxu0 0
    %2168 = vmatprep.subr.bf16.mxu0 0
    %2169 = vmatpush1.bf16.msra.mxu0 0
    %2170 = vmatprep.subr.bf16.mxu0 0
    %2171 = vmatpush1.bf16.msra.mxu0 0
    %2172 = vmatprep.subr.bf16.mxu0 0
    %2173 = vmatpush1.bf16.msra.mxu0 0
    %2174 = vmatprep.subr.bf16.mxu0 0
    %2175 = vmatpush1.bf16.msra.mxu0 0
    %2176 = vmatprep.mubr.bf16.mxu0 0
    %2177 = vmatmul.mubr.bf16.gmra.mrb[0].mxu0 %v2072
    %v2178 = vpop.f32.mrb[0].mxu0
    %v2179 = vadd.f32 %v2094, %v2178
    %v2180 = vpop.f32.mrb[0].mxu0
    %v2181 = vpop.f32.mrb[0].mxu0
    %v2182 = vpop.f32.mrb[0].mxu0
    %2183 = vdwg.mxu0
    %v2184 = vxor.u32 %v2179, 2147483648
    %v2185 = vmul.f32 %v2184, 1.442695
    %v2186 = vpow.pop %v2185
    %v2187 = vadd.f32 %v2186, 1.0
    %v2188 = vrcp.pop %v2187
    %v2189 = vmul.f32 1.0, %v2188
    %2190 = vst [vmem:[#allocation17] sm:$0x3] %v2189
    // Predicated region
    $region74: #{tpu_custom_call.1} parent=1 // pred_check
      _
    $region75: #{tpu_custom_call.1} parent=1 // pred_check_branch
      %2192 = sbr.rel (0) target = $region77
    $region76: #{tpu_custom_call.1} parent=1 // pred_region
      %s2194 = ssub.s32 32, 32
      %2195 = vsyncadd [#allocation4], %s2194
      %s2197 = sshll.u32 [#allocation17], 4
      %s2198 = int_to_ptr.vmem [resolvable:$true] %s2197
      %2200 = dma.vmem_to_hbm [thread:$0]  %s2198, 32, %s9, [#allocation4]
    $region77: #{tpu_custom_call.1} parent=1 // pred_fallthru
      _
    // Predicated region
    $region78: #{tpu_custom_call.1} parent=1 // pred_check
      _
    $region79: #{tpu_custom_call.1} parent=1 // pred_check_branch
      %2202 = sbr.rel (0) target = $region81
    $region80: #{tpu_custom_call.1} parent=1 // pred_region
      %s2204 = ssub.s32 32, 32
      %2205 = vsyncadd [#allocation19], %s2204
      %s2207 = sshll.u32 [#allocation18], 4
      %s2208 = int_to_ptr.vmem [resolvable:$true] %s2207
      %2210 = dma.vmem_to_hbm [thread:$0]  %s2208, 32, %s10, [#allocation19]
    $region81: #{tpu_custom_call.1} parent=1 // pred_fallthru
      _
    // Predicated region
    $region82: #{tpu_custom_call.1} parent=1 // pred_check
      _
    $region83: #{tpu_custom_call.1} parent=1 // pred_check_branch
      %2212 = sbr.rel (0) target = $region85
    $region84: #{tpu_custom_call.1} parent=1 // pred_region
      %2213 = dma.done [#allocation4], 32
    $region85: #{tpu_custom_call.1} parent=1 // pred_fallthru
      _
    // Predicated region
    $region86: #{tpu_custom_call.1} parent=1 // pred_check
      _
    $region87: #{tpu_custom_call.1} parent=1 // pred_check_branch
      %2215 = sbr.rel (0) target = $region89
    $region88: #{tpu_custom_call.1} parent=1 // pred_region
      %2216 = dma.done [#allocation19], 32
    $region89: #{tpu_custom_call.1} parent=1 // pred_fallthru
      _
    %2217 = vsyncpa [#allocation3], 1
    %2218 = vsyncpa [#allocation6], 1
    %2219 = vsyncpa [#allocation9], 1
    %2220 = vsyncpa [#allocation12], 1
    %2221 = vsyncpa [#allocation15], 1
    %2222 = vsyncpa [#allocation4], 1
    %2223 = vsyncpa [#allocation19], 1

</llo_original>
